<compile_context>
chip_gen: v6e
topology: v6e:2x2x1
jax: 0.10.0
libtpu: 0.0.40
codegen_flags: <defaults>
</compile_context>

<pallas_src>
import jax
import jax.numpy as jnp
from jax.experimental import pallas as pl
from jax.experimental.pallas import tpu as pltpu

# ----------------------------- configuration --------------------------------
BATCH = 2
N_NODE = 32      # == EMBED (required by the final .view in the reference code)
N_IN = 1
B_IN = 1
N_OUT = 1
SEQ_IN = 1       # == SEQ_OUT == 1 (required by the res broadcast in the code)
SEQ_OUT = 1
EMBED = 32
HIDDEN = 32      # == EMBED (required by the stacked GRU layers)
N_SP = 2         # n_sp_layer
N_TP = 2         # n_tp_layer
BN_EPS = 1e-5

# Static guards: the conv center-tap shortcut, dropped weight_hh and the
# scalar-adjacency broadcast are only valid under these conditions.
assert SEQ_IN == 1 and SEQ_OUT == 1, "reference forward requires seq_in == seq_out == 1"
assert N_NODE == EMBED and HIDDEN == EMBED, "reference forward requires n_node == hidden == embed"

# ----------------------- stacked-parameter index maps ------------------------
# (32, 32) weight stack
W_FCE = 0
W_CONV = 1
W_FCB = 2                       # fc_bound, output zero-padded 16 -> 32
W_GCN = 3                       # .. W_GCN + 2*N_SP - 1
W_FCC1 = W_GCN + 2 * N_SP       # fc_concat rows acting on the GRU output
W_FCC2 = W_FCC1 + 1             # fc_concat rows acting on the boundary embed (padded)
W_FOE = W_FCC2 + 1
N_W32 = W_FOE + 1               # = 10

# (32,) bias / row stack
B_FCE = 0
B_CONV = 1
B_BNG = 2
B_BNB = 3
B_FCB = 4
B_GCN = 5                       # .. B_GCN + 2*N_SP - 1
B_FCC = B_GCN + 2 * N_SP
B_FOE = B_FCC + 1
B_FOW = B_FOE + 1               # fc_out weight as a lane row
B_FOB = B_FOW + 1               # fc_out bias broadcast to a full row
B_GRU_BHN = B_FOB + 1           # .. + 2*N_TP - 1 : per-layer b_hh[n] rows
N_B32 = B_GRU_BHN + 2 * N_TP    # = 17


# ------------------------------ Pallas kernel --------------------------------
def _fused_kernel(adj_ref, x_ref, bnd_ref, w32_ref, b32_ref,
                  gruw_ref, grub_ref, out_ref):
    """Entire STGCN forward, fully fused and VMEM-resident (gridless)."""
    adj = adj_ref[0]                               # degenerate (1,1) adjacency scalar

    def dot(a, bm):
        return jnp.dot(a, bm, preferred_element_type=jnp.float32)

    def bias(i):
        return b32_ref[i:i + 1, :]                 # (1, EMBED) static row slice

    def fsig(v):
        # sigmoid via approx EUP reciprocal: keeps the divide latency off the
        # serially-dependent GRU gate chain.
        return pl.reciprocal(1.0 + jnp.exp(-v), approx=True)

    def gru_step(x, layer):
        # PyTorch nn.GRU math, gate order (r, z, n).  h0 == 0 and seq_len == 1
        # so the hidden-to-hidden matmul is identically zero; b_hh(r,z) is
        # pre-folded into the packed bias, b_hh(n) stays separate (gated by r).
        g = dot(x, gruw_ref[layer]) + grub_ref[layer]            # one (B,32)x(32,96)
        r = fsig(g[:, 0:HIDDEN])
        z = fsig(g[:, HIDDEN:2 * HIDDEN])
        n = jnp.tanh(g[:, 2 * HIDDEN:3 * HIDDEN] + r * bias(B_GRU_BHN + layer))
        return (1.0 - z) * n                                     # + z * h0, h0 == 0

    # fc_embed (dropout = identity)
    x = dot(x_ref[...], w32_ref[W_FCE]) + bias(B_FCE)            # (B, E)

    # conv1d (NCW, k=3, pad=1, L=1 -> only the center tap is non-zero) + ReLU
    xc = jnp.maximum(dot(x, w32_ref[W_CONV]) + bias(B_CONV), 0.0)

    # BatchNorm1d, training-mode batch statistics over the B*L rows
    # TODO(synk): if the reference module runs in eval() this must switch to
    #   running statistics.
    mean = jnp.mean(xc, axis=0, keepdims=True)
    var = jnp.mean((xc - mean) ** 2, axis=0, keepdims=True)      # biased
    xc = (xc - mean) * jax.lax.rsqrt(var + BN_EPS) * bias(B_BNG) + bias(B_BNB)

    # pool1d(k=1,s=1) and dropout are identities
    res = xc                        # res = x_conv[:, :, -1:]  (post-BN, pre-ReLU)
    x = jnp.maximum(xc, 0.0)        # second ReLU (matches the reference order)

    # fc_bound on the boundary input (output zero-padded to 32 lanes)
    bvec = dot(bnd_ref[...], w32_ref[W_FCB]) + bias(B_FCB)

    # spatial block 1: x = relu(adj @ (x @ W) + b) with scalar adjacency
    for l in range(N_SP):
        x = jnp.maximum(adj * dot(x, w32_ref[W_GCN + l]) + bias(B_GCN + l), 0.0)

    # temporal block 1 (seq_len == 1, h0 == 0); x[:, -seq_out:, :] is identity
    for l in range(N_TP):
        x = gru_step(x, l)

    # concat([x, b]) @ W_concat == x @ W1 + b_pad @ W2_pad  (no in-kernel concat)
    x = jnp.maximum(dot(x, w32_ref[W_FCC1]) + dot(bvec, w32_ref[W_FCC2])
                    + bias(B_FCC), 0.0)

    # spatial block 2
    for l in range(N_SP):
        x = jnp.maximum(adj * dot(x, w32_ref[W_GCN + N_SP + l])
                        + bias(B_GCN + N_SP + l), 0.0)

    # temporal block 2
    for l in range(N_TP):
        x = gru_step(x, N_TP + l)

    # fc_out_embed (dropout = identity)
    x_out = dot(x, w32_ref[W_FOE]) + bias(B_FOE)                 # (B, E)

    # fused head: torch broadcast (B,1,E)+(B,E,1) -> (B,E,E), ReLU, fc_out as a
    # VPU multiply + lane reduce (no N=1 MXU matmul), exact sigmoid.
    xf = jnp.maximum(x_out[:, None, :] + res[:, :, None], 0.0)   # (B, E, E)
    y = jnp.sum(xf * bias(B_FOW)[None, :, :], axis=-1) + bias(B_FOB)   # (B, E)
    out_ref[...] = jax.nn.sigmoid(y)


# ------------------------------ parameters -----------------------------------
def _uniform(key, shape, bound):
    return jax.random.uniform(key, shape, jnp.float32, -bound, bound)


def init_params(key):
    ks = iter(jax.random.split(key, 32))
    w = [None] * N_W32           # each (EMBED, EMBED)
    b = [None] * N_B32           # each (EMBED,)

    # fc_embed
    be = 1.0 / (N_NODE * N_IN) ** 0.5
    w[W_FCE] = _uniform(next(ks), (N_NODE * N_IN, EMBED), be)
    b[B_FCE] = _uniform(next(ks), (EMBED,), be)

    # conv1d: torch weight (Cout, Cin, 3); only the center tap touches real
    # data at SEQ_IN == 1 / pad == 1, pre-transposed once here.
    bc = 1.0 / (EMBED * 3) ** 0.5
    conv_full = _uniform(next(ks), (EMBED, EMBED, 3), bc)
    w[W_CONV] = jnp.transpose(conv_full[:, :, 1])                # (Cin, Cout)
    b[B_CONV] = _uniform(next(ks), (EMBED,), bc)

    # bn1d affine params
    b[B_BNG] = jnp.ones((EMBED,), jnp.float32)
    b[B_BNB] = jnp.zeros((EMBED,), jnp.float32)

    # fc_bound (32 -> 16), zero-padded to 32 output lanes so it stacks with the
    # other (32, 32) weights; the padding is mathematically inert.
    bb = 1.0 / (N_NODE * B_IN) ** 0.5
    fcb_w = _uniform(next(ks), (N_NODE * B_IN, EMBED // 2), bb)
    w[W_FCB] = jnp.concatenate(
        [fcb_w, jnp.zeros((N_NODE * B_IN, EMBED - EMBED // 2), jnp.float32)], axis=1)
    b[B_FCB] = jnp.concatenate(
        [_uniform(next(ks), (EMBED // 2,), bb),
         jnp.zeros((EMBED - EMBED // 2,), jnp.float32)])

    # GCN stacks (dense formulation, relu applied outside in the kernel)
    bg = 1.0 / EMBED ** 0.5
    for l in range(2 * N_SP):
        w[W_GCN + l] = _uniform(next(ks), (EMBED, EMBED), bg)
        b[B_GCN + l] = _uniform(next(ks), (EMBED,), bg)

    # GRU: 2*N_TP layers, gates (r|z|n) packed into one (EMBED, 3H) matrix per
    # layer.  weight_hh omitted (identically zero contribution at seq_len == 1
    # with h0 == 0); bias_hh kept — (r,z) parts folded into the packed bias,
    # the n part stored separately because it is gated by r.
    bh = 1.0 / HIDDEN ** 0.5
    gru_w = _uniform(next(ks), (2 * N_TP, EMBED, 3 * HIDDEN), bh)
    bih = _uniform(next(ks), (2 * N_TP, 3 * HIDDEN), bh)
    bhh = _uniform(next(ks), (2 * N_TP, 3 * HIDDEN), bh)
    gru_b = jnp.concatenate(
        [bih[:, :2 * HIDDEN] + bhh[:, :2 * HIDDEN], bih[:, 2 * HIDDEN:]],
        axis=-1)[:, None, :]                                     # (2*N_TP, 1, 3H)
    for l in range(2 * N_TP):
        b[B_GRU_BHN + l] = bhh[l, 2 * HIDDEN:]

    # fc_concat (48 -> 32), pre-split so there is no in-kernel lane concat; the
    # boundary half is zero-padded to 32 rows (matching the padded fc_bound).
    bcat = 1.0 / (HIDDEN + EMBED // 2) ** 0.5
    fcc_w = _uniform(next(ks), (HIDDEN + EMBED // 2, EMBED), bcat)
    w[W_FCC1] = fcc_w[:HIDDEN]
    w[W_FCC2] = jnp.concatenate(
        [fcc_w[HIDDEN:], jnp.zeros((EMBED - EMBED // 2, EMBED), jnp.float32)], axis=0)
    b[B_FCC] = _uniform(next(ks), (EMBED,), bcat)

    # fc_out_embed
    bo = 1.0 / HIDDEN ** 0.5
    w[W_FOE] = _uniform(next(ks), (HIDDEN, EMBED), bo)
    b[B_FOE] = _uniform(next(ks), (EMBED,), bo)

    # fc_out (32 -> 1): weight stored as a lane row (VPU multiply + reduce in
    # the kernel); scalar bias broadcast to a full row at init time.
    bf = 1.0 / EMBED ** 0.5
    b[B_FOW] = _uniform(next(ks), (EMBED,), bf)
    fo_b = _uniform(next(ks), (), bf)
    b[B_FOB] = jnp.full((EMBED,), fo_b, jnp.float32)

    return {
        "w32": jnp.stack(w),         # (N_W32, 32, 32)
        "b32": jnp.stack(b),         # (N_B32, 32)
        "gru_w": gru_w,              # (2*N_TP, 32, 96)
        "gru_b": gru_b,              # (2*N_TP, 1, 96)
    }


# ------------------------------- forward -------------------------------------
def model_layer_forward(params, X_in, B_in, Adj_in):
    bsz = X_in.shape[0]
    x2d = X_in.reshape(bsz * SEQ_IN, N_NODE * N_IN)      # X_in.view(B, seq_in, -1)
    b2d = B_in.reshape(bsz * SEQ_OUT, N_NODE * B_IN)     # B_in.view(B, seq_out, -1)
    adj = Adj_in.reshape(-1)                             # degenerate (1,1) -> scalar

    vmem = pl.BlockSpec(memory_space=pltpu.MemorySpace.VMEM)
    smem = pl.BlockSpec(memory_space=pltpu.MemorySpace.SMEM)

    out2d = pl.pallas_call(
        _fused_kernel,
        out_shape=jax.ShapeDtypeStruct((bsz, EMBED), jnp.float32),
        in_specs=[smem, vmem, vmem, vmem, vmem, vmem, vmem],
        out_specs=vmem,
    )(adj, x2d, b2d, params["w32"], params["b32"], params["gru_w"], params["gru_b"])

    # lane-dense (B, E) kernel output; final view is free XLA plumbing
    return out2d.reshape(bsz, SEQ_OUT, N_NODE, N_OUT)


# --------------------------------- main ---------------------------------------
if __name__ == "__main__":
    key = jax.random.PRNGKey(0)
    kp, kx, kb, ka = jax.random.split(key, 4)

    params = init_params(kp)
    X_in = jax.random.normal(kx, (BATCH, SEQ_IN, N_NODE, N_IN), jnp.float32)
    B_in = jax.random.normal(kb, (BATCH, SEQ_OUT, N_NODE, B_IN), jnp.float32)
    Adj_in = jax.random.normal(ka, (SEQ_IN, SEQ_IN), jnp.float32)

    out = jax.jit(model_layer_forward)(params, X_in, B_in, Adj_in)
    out = jax.block_until_ready(out)

    assert out.shape == (BATCH, SEQ_OUT, N_NODE, N_OUT)
    assert bool(jnp.all(jnp.isfinite(out)))
    assert bool(jnp.all((out > 0.0) & (out < 1.0)))   # post-sigmoid range
    print("KERNEL_OK")
</pallas_src>

<mosaic_0001>
module attributes {stable_mosaic.version = 11 : i64} {
  func.func @_fused_kernel(%arg0: memref<1xf32, #tpu.memory_space<smem>>, %arg1: memref<2x32xf32, #tpu.memory_space<vmem>>, %arg2: memref<2x32xf32, #tpu.memory_space<vmem>>, %arg3: memref<10x32x32xf32, #tpu.memory_space<vmem>>, %arg4: memref<17x32xf32, #tpu.memory_space<vmem>>, %arg5: memref<4x32x96xf32, #tpu.memory_space<vmem>>, %arg6: memref<4x1x96xf32, #tpu.memory_space<vmem>>, %arg7: memref<2x32xf32, #tpu.memory_space<vmem>>) attributes {dimension_semantics = [], scalar_prefetch = 0 : i64, scratch_operands = 0 : i64, tpu.core_type = #tpu.core_type<tc>} {
    %c0 = arith.constant 0 : index
    %0 = memref.load %arg0[%c0] : memref<1xf32, #tpu.memory_space<smem>>
    %c0_0 = arith.constant 0 : index
    %c0_1 = arith.constant 0 : index
    %1 = vector.load %arg1[%c0_0, %c0_1] : memref<2x32xf32, #tpu.memory_space<vmem>>, vector<2x32xf32>
    %c0_2 = arith.constant 0 : index
    %c0_3 = arith.constant 0 : index
    %c0_4 = arith.constant 0 : index
    %2 = vector.load %arg3[%c0_2, %c0_3, %c0_4] : memref<10x32x32xf32, #tpu.memory_space<vmem>>, vector<1x32x32xf32>
    %3 = vector.shape_cast %2 : vector<1x32x32xf32> to vector<32x32xf32>
    %cst = arith.constant dense<0.000000e+00> : vector<2x32xf32>
    %4 = tpu.matmul %1, %3, %cst {dimension_numbers = #tpu.dot_dimension_numbers<[1], [0], [0], [1], [0, 0, 1, 1], [], []>} : vector<2x32xf32>, vector<32x32xf32>, vector<2x32xf32> -> vector<2x32xf32>
    %c0_5 = arith.constant 0 : index
    %c0_6 = arith.constant 0 : index
    %5 = vector.load %arg4[%c0_5, %c0_6] : memref<17x32xf32, #tpu.memory_space<vmem>>, vector<1x32xf32>
    %6 = vector.broadcast %5 : vector<1x32xf32> to vector<2x32xf32>
    %7 = arith.addf %4, %6 : vector<2x32xf32>
    %c1 = arith.constant 1 : index
    %c0_7 = arith.constant 0 : index
    %c0_8 = arith.constant 0 : index
    %8 = vector.load %arg3[%c1, %c0_7, %c0_8] : memref<10x32x32xf32, #tpu.memory_space<vmem>>, vector<1x32x32xf32>
    %9 = vector.shape_cast %8 : vector<1x32x32xf32> to vector<32x32xf32>
    %cst_9 = arith.constant dense<0.000000e+00> : vector<2x32xf32>
    %10 = tpu.matmul %7, %9, %cst_9 {dimension_numbers = #tpu.dot_dimension_numbers<[1], [0], [0], [1], [0, 0, 1, 1], [], []>} : vector<2x32xf32>, vector<32x32xf32>, vector<2x32xf32> -> vector<2x32xf32>
    %c1_10 = arith.constant 1 : index
    %c0_11 = arith.constant 0 : index
    %11 = vector.load %arg4[%c1_10, %c0_11] : memref<17x32xf32, #tpu.memory_space<vmem>>, vector<1x32xf32>
    %12 = vector.broadcast %11 : vector<1x32xf32> to vector<2x32xf32>
    %13 = arith.addf %10, %12 : vector<2x32xf32>
    %cst_12 = arith.constant 0.000000e+00 : f32
    %14 = vector.broadcast %cst_12 : f32 to vector<2x32xf32>
    %15 = arith.maximumf %13, %14 : vector<2x32xf32>
    %cst_13 = arith.constant dense<0.000000e+00> : vector<32xf32>
    %16 = vector.multi_reduction <add>, %15, %cst_13 [0] : vector<2x32xf32> to vector<32xf32>
    %17 = vector.shape_cast %16 : vector<32xf32> to vector<1x32xf32>
    %cst_14 = arith.constant 2.000000e+00 : f32
    %18 = vector.broadcast %cst_14 : f32 to vector<1x32xf32>
    %19 = arith.divf %17, %18 : vector<1x32xf32>
    %20 = vector.broadcast %19 : vector<1x32xf32> to vector<2x32xf32>
    %21 = arith.subf %15, %20 : vector<2x32xf32>
    %22 = arith.mulf %21, %21 : vector<2x32xf32>
    %cst_15 = arith.constant dense<0.000000e+00> : vector<32xf32>
    %23 = vector.multi_reduction <add>, %22, %cst_15 [0] : vector<2x32xf32> to vector<32xf32>
    %24 = vector.shape_cast %23 : vector<32xf32> to vector<1x32xf32>
    %cst_16 = arith.constant 2.000000e+00 : f32
    %25 = vector.broadcast %cst_16 : f32 to vector<1x32xf32>
    %26 = arith.divf %24, %25 : vector<1x32xf32>
    %27 = vector.broadcast %19 : vector<1x32xf32> to vector<2x32xf32>
    %28 = arith.subf %15, %27 : vector<2x32xf32>
    %cst_17 = arith.constant 9.99999974E-6 : f32
    %29 = vector.broadcast %cst_17 : f32 to vector<1x32xf32>
    %30 = arith.addf %26, %29 : vector<1x32xf32>
    %31 = math.rsqrt %30 : vector<1x32xf32>
    %32 = vector.broadcast %31 : vector<1x32xf32> to vector<2x32xf32>
    %33 = arith.mulf %28, %32 : vector<2x32xf32>
    %c2 = arith.constant 2 : index
    %c0_18 = arith.constant 0 : index
    %34 = vector.load %arg4[%c2, %c0_18] : memref<17x32xf32, #tpu.memory_space<vmem>>, vector<1x32xf32>
    %35 = vector.broadcast %34 : vector<1x32xf32> to vector<2x32xf32>
    %36 = arith.mulf %33, %35 : vector<2x32xf32>
    %c3 = arith.constant 3 : index
    %c0_19 = arith.constant 0 : index
    %37 = vector.load %arg4[%c3, %c0_19] : memref<17x32xf32, #tpu.memory_space<vmem>>, vector<1x32xf32>
    %38 = vector.broadcast %37 : vector<1x32xf32> to vector<2x32xf32>
    %39 = arith.addf %36, %38 : vector<2x32xf32>
    %cst_20 = arith.constant 0.000000e+00 : f32
    %40 = vector.broadcast %cst_20 : f32 to vector<2x32xf32>
    %41 = arith.maximumf %39, %40 : vector<2x32xf32>
    %c0_21 = arith.constant 0 : index
    %c0_22 = arith.constant 0 : index
    %42 = vector.load %arg2[%c0_21, %c0_22] : memref<2x32xf32, #tpu.memory_space<vmem>>, vector<2x32xf32>
    %c2_23 = arith.constant 2 : index
    %c0_24 = arith.constant 0 : index
    %c0_25 = arith.constant 0 : index
    %43 = vector.load %arg3[%c2_23, %c0_24, %c0_25] : memref<10x32x32xf32, #tpu.memory_space<vmem>>, vector<1x32x32xf32>
    %44 = vector.shape_cast %43 : vector<1x32x32xf32> to vector<32x32xf32>
    %cst_26 = arith.constant dense<0.000000e+00> : vector<2x32xf32>
    %45 = tpu.matmul %42, %44, %cst_26 {dimension_numbers = #tpu.dot_dimension_numbers<[1], [0], [0], [1], [0, 0, 1, 1], [], []>} : vector<2x32xf32>, vector<32x32xf32>, vector<2x32xf32> -> vector<2x32xf32>
    %c4 = arith.constant 4 : index
    %c0_27 = arith.constant 0 : index
    %46 = vector.load %arg4[%c4, %c0_27] : memref<17x32xf32, #tpu.memory_space<vmem>>, vector<1x32xf32>
    %47 = vector.broadcast %46 : vector<1x32xf32> to vector<2x32xf32>
    %48 = arith.addf %45, %47 : vector<2x32xf32>
    %c3_28 = arith.constant 3 : index
    %c0_29 = arith.constant 0 : index
    %c0_30 = arith.constant 0 : index
    %49 = vector.load %arg3[%c3_28, %c0_29, %c0_30] : memref<10x32x32xf32, #tpu.memory_space<vmem>>, vector<1x32x32xf32>
    %50 = vector.shape_cast %49 : vector<1x32x32xf32> to vector<32x32xf32>
    %cst_31 = arith.constant dense<0.000000e+00> : vector<2x32xf32>
    %51 = tpu.matmul %41, %50, %cst_31 {dimension_numbers = #tpu.dot_dimension_numbers<[1], [0], [0], [1], [0, 0, 1, 1], [], []>} : vector<2x32xf32>, vector<32x32xf32>, vector<2x32xf32> -> vector<2x32xf32>
    %52 = vector.broadcast %0 : f32 to vector<2x32xf32>
    %53 = arith.mulf %52, %51 : vector<2x32xf32>
    %c5 = arith.constant 5 : index
    %c0_32 = arith.constant 0 : index
    %54 = vector.load %arg4[%c5, %c0_32] : memref<17x32xf32, #tpu.memory_space<vmem>>, vector<1x32xf32>
    %55 = vector.broadcast %54 : vector<1x32xf32> to vector<2x32xf32>
    %56 = arith.addf %53, %55 : vector<2x32xf32>
    %cst_33 = arith.constant 0.000000e+00 : f32
    %57 = vector.broadcast %cst_33 : f32 to vector<2x32xf32>
    %58 = arith.maximumf %56, %57 : vector<2x32xf32>
    %c4_34 = arith.constant 4 : index
    %c0_35 = arith.constant 0 : index
    %c0_36 = arith.constant 0 : index
    %59 = vector.load %arg3[%c4_34, %c0_35, %c0_36] : memref<10x32x32xf32, #tpu.memory_space<vmem>>, vector<1x32x32xf32>
    %60 = vector.shape_cast %59 : vector<1x32x32xf32> to vector<32x32xf32>
    %cst_37 = arith.constant dense<0.000000e+00> : vector<2x32xf32>
    %61 = tpu.matmul %58, %60, %cst_37 {dimension_numbers = #tpu.dot_dimension_numbers<[1], [0], [0], [1], [0, 0, 1, 1], [], []>} : vector<2x32xf32>, vector<32x32xf32>, vector<2x32xf32> -> vector<2x32xf32>
    %62 = vector.broadcast %0 : f32 to vector<2x32xf32>
    %63 = arith.mulf %62, %61 : vector<2x32xf32>
    %c6 = arith.constant 6 : index
    %c0_38 = arith.constant 0 : index
    %64 = vector.load %arg4[%c6, %c0_38] : memref<17x32xf32, #tpu.memory_space<vmem>>, vector<1x32xf32>
    %65 = vector.broadcast %64 : vector<1x32xf32> to vector<2x32xf32>
    %66 = arith.addf %63, %65 : vector<2x32xf32>
    %cst_39 = arith.constant 0.000000e+00 : f32
    %67 = vector.broadcast %cst_39 : f32 to vector<2x32xf32>
    %68 = arith.maximumf %66, %67 : vector<2x32xf32>
    %c0_40 = arith.constant 0 : index
    %c0_41 = arith.constant 0 : index
    %c0_42 = arith.constant 0 : index
    %69 = vector.load %arg5[%c0_40, %c0_41, %c0_42] : memref<4x32x96xf32, #tpu.memory_space<vmem>>, vector<1x32x96xf32>
    %70 = vector.shape_cast %69 : vector<1x32x96xf32> to vector<32x96xf32>
    %cst_43 = arith.constant dense<0.000000e+00> : vector<2x96xf32>
    %71 = tpu.matmul %68, %70, %cst_43 {dimension_numbers = #tpu.dot_dimension_numbers<[1], [0], [0], [1], [0, 0, 1, 1], [], []>} : vector<2x32xf32>, vector<32x96xf32>, vector<2x96xf32> -> vector<2x96xf32>
    %c0_44 = arith.constant 0 : index
    %c0_45 = arith.constant 0 : index
    %c0_46 = arith.constant 0 : index
    %72 = vector.load %arg6[%c0_44, %c0_45, %c0_46] : memref<4x1x96xf32, #tpu.memory_space<vmem>>, vector<1x1x96xf32>
    %73 = vector.shape_cast %72 : vector<1x1x96xf32> to vector<1x96xf32>
    %74 = vector.broadcast %73 : vector<1x96xf32> to vector<2x96xf32>
    %75 = arith.addf %71, %74 : vector<2x96xf32>
    %76 = vector.extract_strided_slice %75 {offsets = [0, 0], sizes = [2, 32], strides = [1, 1]} : vector<2x96xf32> to vector<2x32xf32>
    %cst_47 = arith.constant 0.000000e+00 : f32
    %77 = vector.broadcast %cst_47 : f32 to vector<2x32xf32>
    %78 = arith.subf %77, %76 : vector<2x32xf32>
    %79 = math.exp %78 : vector<2x32xf32>
    %cst_48 = arith.constant 1.000000e+00 : f32
    %80 = vector.broadcast %cst_48 : f32 to vector<2x32xf32>
    %81 = arith.addf %80, %79 : vector<2x32xf32>
    %82 = tpu.reciprocal %81 {approx = true} : vector<2x32xf32> -> vector<2x32xf32>
    %83 = vector.extract_strided_slice %75 {offsets = [0, 32], sizes = [2, 32], strides = [1, 1]} : vector<2x96xf32> to vector<2x32xf32>
    %cst_49 = arith.constant 0.000000e+00 : f32
    %84 = vector.broadcast %cst_49 : f32 to vector<2x32xf32>
    %85 = arith.subf %84, %83 : vector<2x32xf32>
    %86 = math.exp %85 : vector<2x32xf32>
    %cst_50 = arith.constant 1.000000e+00 : f32
    %87 = vector.broadcast %cst_50 : f32 to vector<2x32xf32>
    %88 = arith.addf %87, %86 : vector<2x32xf32>
    %89 = tpu.reciprocal %88 {approx = true} : vector<2x32xf32> -> vector<2x32xf32>
    %90 = vector.extract_strided_slice %75 {offsets = [0, 64], sizes = [2, 32], strides = [1, 1]} : vector<2x96xf32> to vector<2x32xf32>
    %c13 = arith.constant 13 : index
    %c0_51 = arith.constant 0 : index
    %91 = vector.load %arg4[%c13, %c0_51] : memref<17x32xf32, #tpu.memory_space<vmem>>, vector<1x32xf32>
    %92 = vector.broadcast %91 : vector<1x32xf32> to vector<2x32xf32>
    %93 = arith.mulf %82, %92 : vector<2x32xf32>
    %94 = arith.addf %90, %93 : vector<2x32xf32>
    %95 = math.tanh %94 : vector<2x32xf32>
    %cst_52 = arith.constant 1.000000e+00 : f32
    %96 = vector.broadcast %cst_52 : f32 to vector<2x32xf32>
    %97 = arith.subf %96, %89 : vector<2x32xf32>
    %98 = arith.mulf %97, %95 : vector<2x32xf32>
    %c1_53 = arith.constant 1 : index
    %c0_54 = arith.constant 0 : index
    %c0_55 = arith.constant 0 : index
    %99 = vector.load %arg5[%c1_53, %c0_54, %c0_55] : memref<4x32x96xf32, #tpu.memory_space<vmem>>, vector<1x32x96xf32>
    %100 = vector.shape_cast %99 : vector<1x32x96xf32> to vector<32x96xf32>
    %cst_56 = arith.constant dense<0.000000e+00> : vector<2x96xf32>
    %101 = tpu.matmul %98, %100, %cst_56 {dimension_numbers = #tpu.dot_dimension_numbers<[1], [0], [0], [1], [0, 0, 1, 1], [], []>} : vector<2x32xf32>, vector<32x96xf32>, vector<2x96xf32> -> vector<2x96xf32>
    %c1_57 = arith.constant 1 : index
    %c0_58 = arith.constant 0 : index
    %c0_59 = arith.constant 0 : index
    %102 = vector.load %arg6[%c1_57, %c0_58, %c0_59] : memref<4x1x96xf32, #tpu.memory_space<vmem>>, vector<1x1x96xf32>
    %103 = vector.shape_cast %102 : vector<1x1x96xf32> to vector<1x96xf32>
    %104 = vector.broadcast %103 : vector<1x96xf32> to vector<2x96xf32>
    %105 = arith.addf %101, %104 : vector<2x96xf32>
    %106 = vector.extract_strided_slice %105 {offsets = [0, 0], sizes = [2, 32], strides = [1, 1]} : vector<2x96xf32> to vector<2x32xf32>
    %cst_60 = arith.constant 0.000000e+00 : f32
    %107 = vector.broadcast %cst_60 : f32 to vector<2x32xf32>
    %108 = arith.subf %107, %106 : vector<2x32xf32>
    %109 = math.exp %108 : vector<2x32xf32>
    %cst_61 = arith.constant 1.000000e+00 : f32
    %110 = vector.broadcast %cst_61 : f32 to vector<2x32xf32>
    %111 = arith.addf %110, %109 : vector<2x32xf32>
    %112 = tpu.reciprocal %111 {approx = true} : vector<2x32xf32> -> vector<2x32xf32>
    %113 = vector.extract_strided_slice %105 {offsets = [0, 32], sizes = [2, 32], strides = [1, 1]} : vector<2x96xf32> to vector<2x32xf32>
    %cst_62 = arith.constant 0.000000e+00 : f32
    %114 = vector.broadcast %cst_62 : f32 to vector<2x32xf32>
    %115 = arith.subf %114, %113 : vector<2x32xf32>
    %116 = math.exp %115 : vector<2x32xf32>
    %cst_63 = arith.constant 1.000000e+00 : f32
    %117 = vector.broadcast %cst_63 : f32 to vector<2x32xf32>
    %118 = arith.addf %117, %116 : vector<2x32xf32>
    %119 = tpu.reciprocal %118 {approx = true} : vector<2x32xf32> -> vector<2x32xf32>
    %120 = vector.extract_strided_slice %105 {offsets = [0, 64], sizes = [2, 32], strides = [1, 1]} : vector<2x96xf32> to vector<2x32xf32>
    %c14 = arith.constant 14 : index
    %c0_64 = arith.constant 0 : index
    %121 = vector.load %arg4[%c14, %c0_64] : memref<17x32xf32, #tpu.memory_space<vmem>>, vector<1x32xf32>
    %122 = vector.broadcast %121 : vector<1x32xf32> to vector<2x32xf32>
    %123 = arith.mulf %112, %122 : vector<2x32xf32>
    %124 = arith.addf %120, %123 : vector<2x32xf32>
    %125 = math.tanh %124 : vector<2x32xf32>
    %cst_65 = arith.constant 1.000000e+00 : f32
    %126 = vector.broadcast %cst_65 : f32 to vector<2x32xf32>
    %127 = arith.subf %126, %119 : vector<2x32xf32>
    %128 = arith.mulf %127, %125 : vector<2x32xf32>
    %c7 = arith.constant 7 : index
    %c0_66 = arith.constant 0 : index
    %c0_67 = arith.constant 0 : index
    %129 = vector.load %arg3[%c7, %c0_66, %c0_67] : memref<10x32x32xf32, #tpu.memory_space<vmem>>, vector<1x32x32xf32>
    %130 = vector.shape_cast %129 : vector<1x32x32xf32> to vector<32x32xf32>
    %cst_68 = arith.constant dense<0.000000e+00> : vector<2x32xf32>
    %131 = tpu.matmul %128, %130, %cst_68 {dimension_numbers = #tpu.dot_dimension_numbers<[1], [0], [0], [1], [0, 0, 1, 1], [], []>} : vector<2x32xf32>, vector<32x32xf32>, vector<2x32xf32> -> vector<2x32xf32>
    %c8 = arith.constant 8 : index
    %c0_69 = arith.constant 0 : index
    %c0_70 = arith.constant 0 : index
    %132 = vector.load %arg3[%c8, %c0_69, %c0_70] : memref<10x32x32xf32, #tpu.memory_space<vmem>>, vector<1x32x32xf32>
    %133 = vector.shape_cast %132 : vector<1x32x32xf32> to vector<32x32xf32>
    %cst_71 = arith.constant dense<0.000000e+00> : vector<2x32xf32>
    %134 = tpu.matmul %48, %133, %cst_71 {dimension_numbers = #tpu.dot_dimension_numbers<[1], [0], [0], [1], [0, 0, 1, 1], [], []>} : vector<2x32xf32>, vector<32x32xf32>, vector<2x32xf32> -> vector<2x32xf32>
    %135 = arith.addf %131, %134 : vector<2x32xf32>
    %c9 = arith.constant 9 : index
    %c0_72 = arith.constant 0 : index
    %136 = vector.load %arg4[%c9, %c0_72] : memref<17x32xf32, #tpu.memory_space<vmem>>, vector<1x32xf32>
    %137 = vector.broadcast %136 : vector<1x32xf32> to vector<2x32xf32>
    %138 = arith.addf %135, %137 : vector<2x32xf32>
    %cst_73 = arith.constant 0.000000e+00 : f32
    %139 = vector.broadcast %cst_73 : f32 to vector<2x32xf32>
    %140 = arith.maximumf %138, %139 : vector<2x32xf32>
    %c5_74 = arith.constant 5 : index
    %c0_75 = arith.constant 0 : index
    %c0_76 = arith.constant 0 : index
    %141 = vector.load %arg3[%c5_74, %c0_75, %c0_76] : memref<10x32x32xf32, #tpu.memory_space<vmem>>, vector<1x32x32xf32>
    %142 = vector.shape_cast %141 : vector<1x32x32xf32> to vector<32x32xf32>
    %cst_77 = arith.constant dense<0.000000e+00> : vector<2x32xf32>
    %143 = tpu.matmul %140, %142, %cst_77 {dimension_numbers = #tpu.dot_dimension_numbers<[1], [0], [0], [1], [0, 0, 1, 1], [], []>} : vector<2x32xf32>, vector<32x32xf32>, vector<2x32xf32> -> vector<2x32xf32>
    %144 = vector.broadcast %0 : f32 to vector<2x32xf32>
    %145 = arith.mulf %144, %143 : vector<2x32xf32>
    %c7_78 = arith.constant 7 : index
    %c0_79 = arith.constant 0 : index
    %146 = vector.load %arg4[%c7_78, %c0_79] : memref<17x32xf32, #tpu.memory_space<vmem>>, vector<1x32xf32>
    %147 = vector.broadcast %146 : vector<1x32xf32> to vector<2x32xf32>
    %148 = arith.addf %145, %147 : vector<2x32xf32>
    %cst_80 = arith.constant 0.000000e+00 : f32
    %149 = vector.broadcast %cst_80 : f32 to vector<2x32xf32>
    %150 = arith.maximumf %148, %149 : vector<2x32xf32>
    %c6_81 = arith.constant 6 : index
    %c0_82 = arith.constant 0 : index
    %c0_83 = arith.constant 0 : index
    %151 = vector.load %arg3[%c6_81, %c0_82, %c0_83] : memref<10x32x32xf32, #tpu.memory_space<vmem>>, vector<1x32x32xf32>
    %152 = vector.shape_cast %151 : vector<1x32x32xf32> to vector<32x32xf32>
    %cst_84 = arith.constant dense<0.000000e+00> : vector<2x32xf32>
    %153 = tpu.matmul %150, %152, %cst_84 {dimension_numbers = #tpu.dot_dimension_numbers<[1], [0], [0], [1], [0, 0, 1, 1], [], []>} : vector<2x32xf32>, vector<32x32xf32>, vector<2x32xf32> -> vector<2x32xf32>
    %154 = vector.broadcast %0 : f32 to vector<2x32xf32>
    %155 = arith.mulf %154, %153 : vector<2x32xf32>
    %c8_85 = arith.constant 8 : index
    %c0_86 = arith.constant 0 : index
    %156 = vector.load %arg4[%c8_85, %c0_86] : memref<17x32xf32, #tpu.memory_space<vmem>>, vector<1x32xf32>
    %157 = vector.broadcast %156 : vector<1x32xf32> to vector<2x32xf32>
    %158 = arith.addf %155, %157 : vector<2x32xf32>
    %cst_87 = arith.constant 0.000000e+00 : f32
    %159 = vector.broadcast %cst_87 : f32 to vector<2x32xf32>
    %160 = arith.maximumf %158, %159 : vector<2x32xf32>
    %c2_88 = arith.constant 2 : index
    %c0_89 = arith.constant 0 : index
    %c0_90 = arith.constant 0 : index
    %161 = vector.load %arg5[%c2_88, %c0_89, %c0_90] : memref<4x32x96xf32, #tpu.memory_space<vmem>>, vector<1x32x96xf32>
    %162 = vector.shape_cast %161 : vector<1x32x96xf32> to vector<32x96xf32>
    %cst_91 = arith.constant dense<0.000000e+00> : vector<2x96xf32>
    %163 = tpu.matmul %160, %162, %cst_91 {dimension_numbers = #tpu.dot_dimension_numbers<[1], [0], [0], [1], [0, 0, 1, 1], [], []>} : vector<2x32xf32>, vector<32x96xf32>, vector<2x96xf32> -> vector<2x96xf32>
    %c2_92 = arith.constant 2 : index
    %c0_93 = arith.constant 0 : index
    %c0_94 = arith.constant 0 : index
    %164 = vector.load %arg6[%c2_92, %c0_93, %c0_94] : memref<4x1x96xf32, #tpu.memory_space<vmem>>, vector<1x1x96xf32>
    %165 = vector.shape_cast %164 : vector<1x1x96xf32> to vector<1x96xf32>
    %166 = vector.broadcast %165 : vector<1x96xf32> to vector<2x96xf32>
    %167 = arith.addf %163, %166 : vector<2x96xf32>
    %168 = vector.extract_strided_slice %167 {offsets = [0, 0], sizes = [2, 32], strides = [1, 1]} : vector<2x96xf32> to vector<2x32xf32>
    %cst_95 = arith.constant 0.000000e+00 : f32
    %169 = vector.broadcast %cst_95 : f32 to vector<2x32xf32>
    %170 = arith.subf %169, %168 : vector<2x32xf32>
    %171 = math.exp %170 : vector<2x32xf32>
    %cst_96 = arith.constant 1.000000e+00 : f32
    %172 = vector.broadcast %cst_96 : f32 to vector<2x32xf32>
    %173 = arith.addf %172, %171 : vector<2x32xf32>
    %174 = tpu.reciprocal %173 {approx = true} : vector<2x32xf32> -> vector<2x32xf32>
    %175 = vector.extract_strided_slice %167 {offsets = [0, 32], sizes = [2, 32], strides = [1, 1]} : vector<2x96xf32> to vector<2x32xf32>
    %cst_97 = arith.constant 0.000000e+00 : f32
    %176 = vector.broadcast %cst_97 : f32 to vector<2x32xf32>
    %177 = arith.subf %176, %175 : vector<2x32xf32>
    %178 = math.exp %177 : vector<2x32xf32>
    %cst_98 = arith.constant 1.000000e+00 : f32
    %179 = vector.broadcast %cst_98 : f32 to vector<2x32xf32>
    %180 = arith.addf %179, %178 : vector<2x32xf32>
    %181 = tpu.reciprocal %180 {approx = true} : vector<2x32xf32> -> vector<2x32xf32>
    %182 = vector.extract_strided_slice %167 {offsets = [0, 64], sizes = [2, 32], strides = [1, 1]} : vector<2x96xf32> to vector<2x32xf32>
    %c15 = arith.constant 15 : index
    %c0_99 = arith.constant 0 : index
    %183 = vector.load %arg4[%c15, %c0_99] : memref<17x32xf32, #tpu.memory_space<vmem>>, vector<1x32xf32>
    %184 = vector.broadcast %183 : vector<1x32xf32> to vector<2x32xf32>
    %185 = arith.mulf %174, %184 : vector<2x32xf32>
    %186 = arith.addf %182, %185 : vector<2x32xf32>
    %187 = math.tanh %186 : vector<2x32xf32>
    %cst_100 = arith.constant 1.000000e+00 : f32
    %188 = vector.broadcast %cst_100 : f32 to vector<2x32xf32>
    %189 = arith.subf %188, %181 : vector<2x32xf32>
    %190 = arith.mulf %189, %187 : vector<2x32xf32>
    %c3_101 = arith.constant 3 : index
    %c0_102 = arith.constant 0 : index
    %c0_103 = arith.constant 0 : index
    %191 = vector.load %arg5[%c3_101, %c0_102, %c0_103] : memref<4x32x96xf32, #tpu.memory_space<vmem>>, vector<1x32x96xf32>
    %192 = vector.shape_cast %191 : vector<1x32x96xf32> to vector<32x96xf32>
    %cst_104 = arith.constant dense<0.000000e+00> : vector<2x96xf32>
    %193 = tpu.matmul %190, %192, %cst_104 {dimension_numbers = #tpu.dot_dimension_numbers<[1], [0], [0], [1], [0, 0, 1, 1], [], []>} : vector<2x32xf32>, vector<32x96xf32>, vector<2x96xf32> -> vector<2x96xf32>
    %c3_105 = arith.constant 3 : index
    %c0_106 = arith.constant 0 : index
    %c0_107 = arith.constant 0 : index
    %194 = vector.load %arg6[%c3_105, %c0_106, %c0_107] : memref<4x1x96xf32, #tpu.memory_space<vmem>>, vector<1x1x96xf32>
    %195 = vector.shape_cast %194 : vector<1x1x96xf32> to vector<1x96xf32>
    %196 = vector.broadcast %195 : vector<1x96xf32> to vector<2x96xf32>
    %197 = arith.addf %193, %196 : vector<2x96xf32>
    %198 = vector.extract_strided_slice %197 {offsets = [0, 0], sizes = [2, 32], strides = [1, 1]} : vector<2x96xf32> to vector<2x32xf32>
    %cst_108 = arith.constant 0.000000e+00 : f32
    %199 = vector.broadcast %cst_108 : f32 to vector<2x32xf32>
    %200 = arith.subf %199, %198 : vector<2x32xf32>
    %201 = math.exp %200 : vector<2x32xf32>
    %cst_109 = arith.constant 1.000000e+00 : f32
    %202 = vector.broadcast %cst_109 : f32 to vector<2x32xf32>
    %203 = arith.addf %202, %201 : vector<2x32xf32>
    %204 = tpu.reciprocal %203 {approx = true} : vector<2x32xf32> -> vector<2x32xf32>
    %205 = vector.extract_strided_slice %197 {offsets = [0, 32], sizes = [2, 32], strides = [1, 1]} : vector<2x96xf32> to vector<2x32xf32>
    %cst_110 = arith.constant 0.000000e+00 : f32
    %206 = vector.broadcast %cst_110 : f32 to vector<2x32xf32>
    %207 = arith.subf %206, %205 : vector<2x32xf32>
    %208 = math.exp %207 : vector<2x32xf32>
    %cst_111 = arith.constant 1.000000e+00 : f32
    %209 = vector.broadcast %cst_111 : f32 to vector<2x32xf32>
    %210 = arith.addf %209, %208 : vector<2x32xf32>
    %211 = tpu.reciprocal %210 {approx = true} : vector<2x32xf32> -> vector<2x32xf32>
    %212 = vector.extract_strided_slice %197 {offsets = [0, 64], sizes = [2, 32], strides = [1, 1]} : vector<2x96xf32> to vector<2x32xf32>
    %c16 = arith.constant 16 : index
    %c0_112 = arith.constant 0 : index
    %213 = vector.load %arg4[%c16, %c0_112] : memref<17x32xf32, #tpu.memory_space<vmem>>, vector<1x32xf32>
    %214 = vector.broadcast %213 : vector<1x32xf32> to vector<2x32xf32>
    %215 = arith.mulf %204, %214 : vector<2x32xf32>
    %216 = arith.addf %212, %215 : vector<2x32xf32>
    %217 = math.tanh %216 : vector<2x32xf32>
    %cst_113 = arith.constant 1.000000e+00 : f32
    %218 = vector.broadcast %cst_113 : f32 to vector<2x32xf32>
    %219 = arith.subf %218, %211 : vector<2x32xf32>
    %220 = arith.mulf %219, %217 : vector<2x32xf32>
    %c9_114 = arith.constant 9 : index
    %c0_115 = arith.constant 0 : index
    %c0_116 = arith.constant 0 : index
    %221 = vector.load %arg3[%c9_114, %c0_115, %c0_116] : memref<10x32x32xf32, #tpu.memory_space<vmem>>, vector<1x32x32xf32>
    %222 = vector.shape_cast %221 : vector<1x32x32xf32> to vector<32x32xf32>
    %cst_117 = arith.constant dense<0.000000e+00> : vector<2x32xf32>
    %223 = tpu.matmul %220, %222, %cst_117 {dimension_numbers = #tpu.dot_dimension_numbers<[1], [0], [0], [1], [0, 0, 1, 1], [], []>} : vector<2x32xf32>, vector<32x32xf32>, vector<2x32xf32> -> vector<2x32xf32>
    %c10 = arith.constant 10 : index
    %c0_118 = arith.constant 0 : index
    %224 = vector.load %arg4[%c10, %c0_118] : memref<17x32xf32, #tpu.memory_space<vmem>>, vector<1x32xf32>
    %225 = vector.broadcast %224 : vector<1x32xf32> to vector<2x32xf32>
    %226 = arith.addf %223, %225 : vector<2x32xf32>
    %227 = vector.shape_cast %226 : vector<2x32xf32> to vector<2x1x32xf32>
    %228 = vector.shape_cast %39 : vector<2x32xf32> to vector<2x32x1xf32>
    %229 = vector.broadcast %227 : vector<2x1x32xf32> to vector<2x32x32xf32>
    %230 = vector.broadcast %228 : vector<2x32x1xf32> to vector<2x32x32xf32>
    %231 = arith.addf %229, %230 : vector<2x32x32xf32>
    %cst_119 = arith.constant 0.000000e+00 : f32
    %232 = vector.broadcast %cst_119 : f32 to vector<2x32x32xf32>
    %233 = arith.maximumf %231, %232 : vector<2x32x32xf32>
    %c11 = arith.constant 11 : index
    %c0_120 = arith.constant 0 : index
    %234 = vector.load %arg4[%c11, %c0_120] : memref<17x32xf32, #tpu.memory_space<vmem>>, vector<1x32xf32>
    %235 = vector.shape_cast %234 : vector<1x32xf32> to vector<1x1x32xf32>
    %236 = vector.broadcast %235 : vector<1x1x32xf32> to vector<2x32x32xf32>
    %237 = arith.mulf %233, %236 : vector<2x32x32xf32>
    %cst_121 = arith.constant dense<0.000000e+00> : vector<2x32xf32>
    %238 = vector.multi_reduction <add>, %237, %cst_121 [2] : vector<2x32x32xf32> to vector<2x32xf32>
    %c12 = arith.constant 12 : index
    %c0_122 = arith.constant 0 : index
    %239 = vector.load %arg4[%c12, %c0_122] : memref<17x32xf32, #tpu.memory_space<vmem>>, vector<1x32xf32>
    %240 = vector.broadcast %239 : vector<1x32xf32> to vector<2x32xf32>
    %241 = arith.addf %238, %240 : vector<2x32xf32>
    %242 = arith.negf %241 : vector<2x32xf32>
    %243 = math.exp %242 : vector<2x32xf32>
    %cst_123 = arith.constant 1.000000e+00 : f32
    %244 = vector.broadcast %cst_123 : f32 to vector<2x32xf32>
    %245 = arith.addf %244, %243 : vector<2x32xf32>
    %246 = arith.divf %244, %245 : vector<2x32xf32>
    %c0_124 = arith.constant 0 : index
    %c0_125 = arith.constant 0 : index
    %247 = vector.load %arg7[%c0_124, %c0_125] : memref<2x32xf32, #tpu.memory_space<vmem>>, vector<2x32xf32>
    tpu.vector_store %arg7[%c0_124, %c0_125], %246 {strides = array<i32>} : memref<2x32xf32, #tpu.memory_space<vmem>>, vector<2x32xf32>,
    return
  }
}

</mosaic_0001>

<llo_original>
// kernel: model_layer_forward.1
$region0: #{model_layer_forward.1}
  #allocation0 [shape = 'u32[]', space=smem, size = 0x4, offset = 0x4, fixed_abs, tag = 'smem constant byte address 0x4 - core index']
  #allocation1 [shape = 'u32[144,128]{1,0:T(1,128)}', space=vmem, size = 0x12000, scoped, tag = 'internal scratch']
  #allocation2 [shape = 'f32[1]{0:T(128)S(6)}', space=smem, size = 0x200, scoped, tag = 'scoped memory for model_layer_forward.1']
  %s0 = inlined_call_operand.<no memory space> [shape: f32[1], index: 0, kind: input, shape index: {}]
  %s1 = inlined_call_operand.vmem [shape: f32[2,32], index: 1, kind: input, shape index: {}]
  %s2 = inlined_call_operand.vmem [shape: f32[2,32], index: 2, kind: input, shape index: {}]
  %s3 = inlined_call_operand.hbm [shape: f32[10,32,32], index: 3, kind: input, shape index: {}]
  %s4 = inlined_call_operand.hbm [shape: f32[17,32], index: 4, kind: input, shape index: {}]
  %s5 = inlined_call_operand.hbm [shape: f32[4,32,96], index: 5, kind: input, shape index: {}]
  %s6 = inlined_call_operand.vmem [shape: f32[4,1,96], index: 6, kind: input, shape index: {}]
  %s7 = inlined_call_operand.hbm [shape: f32[2,32], index: 7, kind: output, shape index: {}]
  %s8 = sld [smem:[#allocation0]]
  $region50: #{model_layer_forward.1} parent=0
    _
  %s10 = ssub.s32 1, %s8
  %s11 = scalar_select 0, %s10, %s8
  %12 = sst [smem:[#allocation2]] %s0
  $region1: #{model_layer_forward.1} parent=0
    #allocation3 [shape = 'u8[163840]{0}', space=vmem, size = 0x28000, scoped, tag = 'input window, operand 3, single buffered']
    #allocation4 [shape = 's32[1]{0}', space=sflag, size = 0x4, scoped, tag = 'scoped memory for model_layer_forward.1']
    #allocation5 [shape = 's32[1]{0}', space=sflag, size = 0x4, scoped, tag = 'scoped memory for model_layer_forward.1']
    #allocation6 [shape = 'u8[12288]{0}', space=vmem, size = 0x3000, scoped, tag = 'input window, operand 4, single buffered']
    #allocation7 [shape = 's32[1]{0}', space=sflag, size = 0x4, scoped, tag = 'scoped memory for model_layer_forward.1']
    #allocation8 [shape = 'u8[65536]{0}', space=vmem, size = 0x10000, scoped, tag = 'input window, operand 5, single buffered']
    #allocation9 [shape = 'u8[1024]{0}', space=vmem, size = 0x400, scoped, tag = 'output window, operand 0, single buffered']
    %13 = vsyncpa [#allocation4], 0
    %14 = vsyncpa [#allocation7], 0
    %15 = vsyncpa [#allocation5], 0
    // Predicated region
    $region2: #{model_layer_forward.1} parent=1 // pred_check
      _
    $region3: #{model_layer_forward.1} parent=1 // pred_check_branch
      %17 = sbr.rel (0) target = $region5
    $region4: #{model_layer_forward.1} parent=1 // pred_region
      _
    $region5: #{model_layer_forward.1} parent=1 // pred_fallthru
      _
    // Predicated region
    $region6: #{model_layer_forward.1} parent=1 // pred_check
      _
    $region7: #{model_layer_forward.1} parent=1 // pred_check_branch
      %19 = sbr.rel (0) target = $region9
    $region8: #{model_layer_forward.1} parent=1 // pred_region
      _
    $region9: #{model_layer_forward.1} parent=1 // pred_fallthru
      _
    // Predicated region
    $region10: #{model_layer_forward.1} parent=1 // pred_check
      _
    $region11: #{model_layer_forward.1} parent=1 // pred_check_branch
      %21 = sbr.rel (0) target = $region13
    $region12: #{model_layer_forward.1} parent=1 // pred_region
      _
    $region13: #{model_layer_forward.1} parent=1 // pred_fallthru
      _
    // Predicated region
    $region14: #{model_layer_forward.1} parent=1 // pred_check
      _
    $region15: #{model_layer_forward.1} parent=1 // pred_check_branch
      %23 = sbr.rel (0) target = $region17
    $region16: #{model_layer_forward.1} parent=1 // pred_region
      %s25 = ssub.s32 5120, 5120
      %26 = vsyncadd [#allocation4], %s25
      %s27 = sshll.u32 [#allocation3], 4
      %s28 = int_to_ptr.vmem [resolvable:$true] %s27
      %33 = dma.hbm_to_vmem [thread:$0]  %s3, 5120, %s28, [#allocation4], 128, 128, 8
    $region17: #{model_layer_forward.1} parent=1 // pred_fallthru
      _
    // Predicated region
    $region18: #{model_layer_forward.1} parent=1 // pred_check
      _
    $region19: #{model_layer_forward.1} parent=1 // pred_check_branch
      %35 = sbr.rel (0) target = $region21
    $region20: #{model_layer_forward.1} parent=1 // pred_region
      %s37 = ssub.s32 384, 384
      %38 = vsyncadd [#allocation7], %s37
      %s39 = sshll.u32 [#allocation6], 4
      %s40 = int_to_ptr.vmem [resolvable:$true] %s39
      %45 = dma.hbm_to_vmem [thread:$0]  %s4, 384, %s40, [#allocation7], 128, 128, 8
    $region21: #{model_layer_forward.1} parent=1 // pred_fallthru
      _
    // Predicated region
    $region22: #{model_layer_forward.1} parent=1 // pred_check
      _
    $region23: #{model_layer_forward.1} parent=1 // pred_check_branch
      %47 = sbr.rel (0) target = $region25
    $region24: #{model_layer_forward.1} parent=1 // pred_region
      %s49 = ssub.s32 2048, 2048
      %50 = vsyncadd [#allocation7], %s49
      %s51 = sshll.u32 [#allocation8], 4
      %s52 = int_to_ptr.vmem [resolvable:$true] %s51
      %57 = dma.hbm_to_vmem [thread:$0]  %s5, 2048, %s52, [#allocation7], 128, 128, 8
    $region25: #{model_layer_forward.1} parent=1 // pred_fallthru
      _
    // Predicated region
    $region26: #{model_layer_forward.1} parent=1 // pred_check
      _
    $region27: #{model_layer_forward.1} parent=1 // pred_check_branch
      %59 = sbr.rel (0) target = $region29
    $region28: #{model_layer_forward.1} parent=1 // pred_region
      _
    $region29: #{model_layer_forward.1} parent=1 // pred_fallthru
      _
    // Predicated region
    $region30: #{model_layer_forward.1} parent=1 // pred_check
      _
    $region31: #{model_layer_forward.1} parent=1 // pred_check_branch
      %61 = sbr.rel (0) target = $region33
    $region32: #{model_layer_forward.1} parent=1 // pred_region
      %62 = dma.done [#allocation4], 5120
    $region33: #{model_layer_forward.1} parent=1 // pred_fallthru
      _
    // Predicated region
    $region34: #{model_layer_forward.1} parent=1 // pred_check
      _
    $region35: #{model_layer_forward.1} parent=1 // pred_check_branch
      %64 = sbr.rel (0) target = $region37
    $region36: #{model_layer_forward.1} parent=1 // pred_region
      %65 = dma.done [#allocation7], 384
    $region37: #{model_layer_forward.1} parent=1 // pred_fallthru
      _
    // Predicated region
    $region38: #{model_layer_forward.1} parent=1 // pred_check
      _
    $region39: #{model_layer_forward.1} parent=1 // pred_check_branch
      %67 = sbr.rel (0) target = $region41
    $region40: #{model_layer_forward.1} parent=1 // pred_region
      %68 = dma.done [#allocation7], 2048
    $region41: #{model_layer_forward.1} parent=1 // pred_fallthru
      _
    %s69 = sld [smem:[#allocation2]]
    %v70 = vld [vmem:[%s1] sm:$0x3]
    %v71 = vld [vmem:[#allocation3] sm:$0xff]
    %v72 = vld [vmem:[#allocation3 + $0x8] sm:$0xff]
    %v73 = vld [vmem:[#allocation3 + $0x10] sm:$0xff]
    %v74 = vld [vmem:[#allocation3 + $0x18] sm:$0xff]
    %v75 = vld [vmem:[#allocation6] sm:$0x1]
    %v76 = vlaneseq
    %v77 = vshrl.u32 %v76, 7
    %v78 = vsub.s32 0, %v77
    %v79 = vrot.slane %v75, %v78
    %vm80 = vcmask 261120
    %v82 = vsel %vm80, %v70, 0
    %84 = vmatprep.subr.mxu0 0.0
    %85 = vmatpush1.msra.mxu0 0.0
    %86 = vmatprep.subr.mxu0 0.0
    %87 = vmatpush1.msra.mxu0 0.0
    %88 = vmatprep.subr.mxu0 0.0
    %89 = vmatpush1.msra.mxu0 0.0
    %90 = vmatprep.subr.mxu0 0.0
    %91 = vmatpush1.msra.mxu0 0.0
    %92 = vmatprep.subr.mxu0 0.0
    %93 = vmatpush1.msra.mxu0 0.0
    %94 = vmatprep.subr.mxu0 0.0
    %95 = vmatpush1.msra.mxu0 0.0
    %96 = vmatprep.subr.mxu0 0.0
    %97 = vmatpush1.msra.mxu0 0.0
    %98 = vmatprep.subr.mxu0 0.0
    %99 = vmatpush1.msra.mxu0 0.0
    %100 = vmatprep.subr.mxu0 0.0
    %101 = vmatpush1.msra.mxu0 0.0
    %102 = vmatprep.subr.mxu0 0.0
    %103 = vmatpush1.msra.mxu0 0.0
    %104 = vmatprep.subr.mxu0 0.0
    %105 = vmatpush1.msra.mxu0 0.0
    %106 = vmatprep.subr.mxu0 0.0
    %107 = vmatpush1.msra.mxu0 0.0
    %108 = vmatprep.subr.mxu0 0.0
    %109 = vmatpush1.msra.mxu0 %v74
    %110 = vmatprep.subr.mxu0 0.0
    %111 = vmatpush1.msra.mxu0 %v73
    %112 = vmatprep.subr.mxu0 0.0
    %113 = vmatpush1.msra.mxu0 %v72
    %114 = vmatprep.subr.mxu0 0.0
    %115 = vmatpush1.msra.mxu0 %v71
    %116 = vmatprep.subr.mxu0 0.0
    %117 = vmatpush2.msra.mxu0 0.0
    %118 = vmatprep.subr.mxu0 0.0
    %119 = vmatpush2.msra.mxu0 0.0
    %120 = vmatprep.subr.mxu0 0.0
    %121 = vmatpush2.msra.mxu0 0.0
    %122 = vmatprep.subr.mxu0 0.0
    %123 = vmatpush2.msra.mxu0 0.0
    %124 = vmatprep.subr.mxu0 0.0
    %125 = vmatpush2.msra.mxu0 0.0
    %126 = vmatprep.subr.mxu0 0.0
    %127 = vmatpush2.msra.mxu0 0.0
    %128 = vmatprep.subr.mxu0 0.0
    %129 = vmatpush2.msra.mxu0 0.0
    %130 = vmatprep.subr.mxu0 0.0
    %131 = vmatpush2.msra.mxu0 0.0
    %132 = vmatprep.subr.mxu0 0.0
    %133 = vmatpush2.msra.mxu0 0.0
    %134 = vmatprep.subr.mxu0 0.0
    %135 = vmatpush2.msra.mxu0 0.0
    %136 = vmatprep.subr.mxu0 0.0
    %137 = vmatpush2.msra.mxu0 0.0
    %138 = vmatprep.subr.mxu0 0.0
    %139 = vmatpush2.msra.mxu0 0.0
    %140 = vmatprep.subr.mxu0 0.0
    %141 = vmatpush2.msra.mxu0 0.0
    %142 = vmatprep.subr.mxu0 0.0
    %143 = vmatpush2.msra.mxu0 0.0
    %144 = vmatprep.subr.mxu0 0.0
    %145 = vmatpush2.msra.mxu0 0.0
    %146 = vmatprep.subr.mxu0 0.0
    %147 = vmatpush2.msra.mxu0 0.0
    %148 = vmatprep.mubr.f32.mxu0 0.0
    %149 = vmatmul.mubr.f32.gmra.mxu0 %v82
    %v150 = vpop.f32.mrf.mxu0
    %v151 = vadd.f32 %v79, %v150
    %v152 = vpop.f32.mrf.mxu0
    %153 = vdwg.mxu0
    %s154 = scalar_lea.vmem [#allocation3], 32
    %v155 = vld [vmem:[%s154] sm:$0xff]
    %v156 = vld [vmem:[%s154 + $0x8] sm:$0xff]
    %v157 = vld [vmem:[%s154 + $0x10] sm:$0xff]
    %v158 = vld [vmem:[%s154 + $0x18] sm:$0xff]
    %v159 = vld [vmem:[#allocation6 + $0x1] sm:$0x1]
    %v160 = vlaneseq
    %v161 = vshrl.u32 %v160, 7
    %v162 = vsub.s32 0, %v161
    %v163 = vrot.slane %v159, %v162
    %v165 = vsel %vm80, %v151, 0
    %167 = vmatprep.subr.mxu0 0.0
    %168 = vmatpush1.msra.mxu0 0.0
    %169 = vmatprep.subr.mxu0 0.0
    %170 = vmatpush1.msra.mxu0 0.0
    %171 = vmatprep.subr.mxu0 0.0
    %172 = vmatpush1.msra.mxu0 0.0
    %173 = vmatprep.subr.mxu0 0.0
    %174 = vmatpush1.msra.mxu0 0.0
    %175 = vmatprep.subr.mxu0 0.0
    %176 = vmatpush1.msra.mxu0 0.0
    %177 = vmatprep.subr.mxu0 0.0
    %178 = vmatpush1.msra.mxu0 0.0
    %179 = vmatprep.subr.mxu0 0.0
    %180 = vmatpush1.msra.mxu0 0.0
    %181 = vmatprep.subr.mxu0 0.0
    %182 = vmatpush1.msra.mxu0 0.0
    %183 = vmatprep.subr.mxu0 0.0
    %184 = vmatpush1.msra.mxu0 0.0
    %185 = vmatprep.subr.mxu0 0.0
    %186 = vmatpush1.msra.mxu0 0.0
    %187 = vmatprep.subr.mxu0 0.0
    %188 = vmatpush1.msra.mxu0 0.0
    %189 = vmatprep.subr.mxu0 0.0
    %190 = vmatpush1.msra.mxu0 0.0
    %191 = vmatprep.subr.mxu0 0.0
    %192 = vmatpush1.msra.mxu0 %v158
    %193 = vmatprep.subr.mxu0 0.0
    %194 = vmatpush1.msra.mxu0 %v157
    %195 = vmatprep.subr.mxu0 0.0
    %196 = vmatpush1.msra.mxu0 %v156
    %197 = vmatprep.subr.mxu0 0.0
    %198 = vmatpush1.msra.mxu0 %v155
    %199 = vmatprep.subr.mxu0 0.0
    %200 = vmatpush2.msra.mxu0 0.0
    %201 = vmatprep.subr.mxu0 0.0
    %202 = vmatpush2.msra.mxu0 0.0
    %203 = vmatprep.subr.mxu0 0.0
    %204 = vmatpush2.msra.mxu0 0.0
    %205 = vmatprep.subr.mxu0 0.0
    %206 = vmatpush2.msra.mxu0 0.0
    %207 = vmatprep.subr.mxu0 0.0
    %208 = vmatpush2.msra.mxu0 0.0
    %209 = vmatprep.subr.mxu0 0.0
    %210 = vmatpush2.msra.mxu0 0.0
    %211 = vmatprep.subr.mxu0 0.0
    %212 = vmatpush2.msra.mxu0 0.0
    %213 = vmatprep.subr.mxu0 0.0
    %214 = vmatpush2.msra.mxu0 0.0
    %215 = vmatprep.subr.mxu0 0.0
    %216 = vmatpush2.msra.mxu0 0.0
    %217 = vmatprep.subr.mxu0 0.0
    %218 = vmatpush2.msra.mxu0 0.0
    %219 = vmatprep.subr.mxu0 0.0
    %220 = vmatpush2.msra.mxu0 0.0
    %221 = vmatprep.subr.mxu0 0.0
    %222 = vmatpush2.msra.mxu0 0.0
    %223 = vmatprep.subr.mxu0 0.0
    %224 = vmatpush2.msra.mxu0 0.0
    %225 = vmatprep.subr.mxu0 0.0
    %226 = vmatpush2.msra.mxu0 0.0
    %227 = vmatprep.subr.mxu0 0.0
    %228 = vmatpush2.msra.mxu0 0.0
    %229 = vmatprep.subr.mxu0 0.0
    %230 = vmatpush2.msra.mxu0 0.0
    %231 = vmatprep.mubr.f32.mxu0 0.0
    %232 = vmatmul.mubr.f32.gmra.mxu0 %v165
    %v233 = vpop.f32.mrf.mxu0
    %v234 = vadd.f32 %v163, %v233
    %v235 = vpop.f32.mrf.mxu0
    %236 = vdwg.mxu0
    %v237 = vmax.f32 %v234, 0.0
    %vm238 = vcmask 254976
    %v239 = vsel %vm238, %v237, 0.0
    %v240 = vrot.slane %v239, 4
    %v241 = vadd.f32 %v239, %v240
    %v242 = vrot.slane %v241, 2
    %v243 = vadd.f32 %v241, %v242
    %v244 = vrot.slane %v243, 1
    %v245 = vadd.f32 %v243, %v244
    %v246 = vrcp.pop 2.0
    %v247 = vmul.f32 %v245, %v246
    %v248 = vsub.f32 %v237, %v247
    %v249 = vmul.f32 %v248, %v248
    %v250 = vsel %vm238, %v249, 0.0
    %v251 = vrot.slane %v250, 4
    %v252 = vadd.f32 %v250, %v251
    %v253 = vrot.slane %v252, 2
    %v254 = vadd.f32 %v252, %v253
    %v255 = vrot.slane %v254, 1
    %v256 = vadd.f32 %v254, %v255
    %v257 = vmul.f32 %v256, %v246
    %v258 = vadd.f32 %v257, 1e-05
    %v259 = vrsqrt.pop %v258
    %v260 = vmul.f32 %v248, %v259
    %v261 = vld [vmem:[#allocation6 + $0x2] sm:$0x1]
    %v262 = vlaneseq
    %v263 = vshrl.u32 %v262, 7
    %v264 = vsub.s32 0, %v263
    %v265 = vrot.slane %v261, %v264
    %v266 = vmul.f32 %v260, %v265
    %v267 = vld [vmem:[#allocation6 + $0x3] sm:$0x1]
    %v268 = vlaneseq
    %v269 = vshrl.u32 %v268, 7
    %v270 = vsub.s32 0, %v269
    %v271 = vrot.slane %v267, %v270
    %v272 = vadd.f32 %v266, %v271
    %v273 = vmax.f32 %v272, 0.0
    %v274 = vld [vmem:[%s2] sm:$0x3]
    %s275 = scalar_lea.vmem [#allocation3], 64
    %v276 = vld [vmem:[%s275] sm:$0xff]
    %v277 = vld [vmem:[%s275 + $0x8] sm:$0xff]
    %v278 = vld [vmem:[%s275 + $0x10] sm:$0xff]
    %v279 = vld [vmem:[%s275 + $0x18] sm:$0xff]
    %v280 = vld [vmem:[#allocation6 + $0x4] sm:$0x1]
    %v281 = vlaneseq
    %v282 = vshrl.u32 %v281, 7
    %v283 = vsub.s32 0, %v282
    %v284 = vrot.slane %v280, %v283
    %v286 = vsel %vm80, %v274, 0
    %288 = vmatprep.subr.mxu0 0.0
    %289 = vmatpush1.msra.mxu0 0.0
    %290 = vmatprep.subr.mxu0 0.0
    %291 = vmatpush1.msra.mxu0 0.0
    %292 = vmatprep.subr.mxu0 0.0
    %293 = vmatpush1.msra.mxu0 0.0
    %294 = vmatprep.subr.mxu0 0.0
    %295 = vmatpush1.msra.mxu0 0.0
    %296 = vmatprep.subr.mxu0 0.0
    %297 = vmatpush1.msra.mxu0 0.0
    %298 = vmatprep.subr.mxu0 0.0
    %299 = vmatpush1.msra.mxu0 0.0
    %300 = vmatprep.subr.mxu0 0.0
    %301 = vmatpush1.msra.mxu0 0.0
    %302 = vmatprep.subr.mxu0 0.0
    %303 = vmatpush1.msra.mxu0 0.0
    %304 = vmatprep.subr.mxu0 0.0
    %305 = vmatpush1.msra.mxu0 0.0
    %306 = vmatprep.subr.mxu0 0.0
    %307 = vmatpush1.msra.mxu0 0.0
    %308 = vmatprep.subr.mxu0 0.0
    %309 = vmatpush1.msra.mxu0 0.0
    %310 = vmatprep.subr.mxu0 0.0
    %311 = vmatpush1.msra.mxu0 0.0
    %312 = vmatprep.subr.mxu0 0.0
    %313 = vmatpush1.msra.mxu0 %v279
    %314 = vmatprep.subr.mxu0 0.0
    %315 = vmatpush1.msra.mxu0 %v278
    %316 = vmatprep.subr.mxu0 0.0
    %317 = vmatpush1.msra.mxu0 %v277
    %318 = vmatprep.subr.mxu0 0.0
    %319 = vmatpush1.msra.mxu0 %v276
    %320 = vmatprep.subr.mxu0 0.0
    %321 = vmatpush2.msra.mxu0 0.0
    %322 = vmatprep.subr.mxu0 0.0
    %323 = vmatpush2.msra.mxu0 0.0
    %324 = vmatprep.subr.mxu0 0.0
    %325 = vmatpush2.msra.mxu0 0.0
    %326 = vmatprep.subr.mxu0 0.0
    %327 = vmatpush2.msra.mxu0 0.0
    %328 = vmatprep.subr.mxu0 0.0
    %329 = vmatpush2.msra.mxu0 0.0
    %330 = vmatprep.subr.mxu0 0.0
    %331 = vmatpush2.msra.mxu0 0.0
    %332 = vmatprep.subr.mxu0 0.0
    %333 = vmatpush2.msra.mxu0 0.0
    %334 = vmatprep.subr.mxu0 0.0
    %335 = vmatpush2.msra.mxu0 0.0
    %336 = vmatprep.subr.mxu0 0.0
    %337 = vmatpush2.msra.mxu0 0.0
    %338 = vmatprep.subr.mxu0 0.0
    %339 = vmatpush2.msra.mxu0 0.0
    %340 = vmatprep.subr.mxu0 0.0
    %341 = vmatpush2.msra.mxu0 0.0
    %342 = vmatprep.subr.mxu0 0.0
    %343 = vmatpush2.msra.mxu0 0.0
    %344 = vmatprep.subr.mxu0 0.0
    %345 = vmatpush2.msra.mxu0 0.0
    %346 = vmatprep.subr.mxu0 0.0
    %347 = vmatpush2.msra.mxu0 0.0
    %348 = vmatprep.subr.mxu0 0.0
    %349 = vmatpush2.msra.mxu0 0.0
    %350 = vmatprep.subr.mxu0 0.0
    %351 = vmatpush2.msra.mxu0 0.0
    %352 = vmatprep.mubr.f32.mxu0 0.0
    %353 = vmatmul.mubr.f32.gmra.mxu0 %v286
    %v354 = vpop.f32.mrf.mxu0
    %v355 = vadd.f32 %v284, %v354
    %v356 = vpop.f32.mrf.mxu0
    %357 = vdwg.mxu0
    %s358 = scalar_lea.vmem [#allocation3], 96
    %v359 = vld [vmem:[%s358] sm:$0xff]
    %v360 = vld [vmem:[%s358 + $0x8] sm:$0xff]
    %v361 = vld [vmem:[%s358 + $0x10] sm:$0xff]
    %v362 = vld [vmem:[%s358 + $0x18] sm:$0xff]
    %v364 = vsel %vm80, %v273, 0
    %366 = vmatprep.subr.mxu0 0.0
    %367 = vmatpush1.msra.mxu0 0.0
    %368 = vmatprep.subr.mxu0 0.0
    %369 = vmatpush1.msra.mxu0 0.0
    %370 = vmatprep.subr.mxu0 0.0
    %371 = vmatpush1.msra.mxu0 0.0
    %372 = vmatprep.subr.mxu0 0.0
    %373 = vmatpush1.msra.mxu0 0.0
    %374 = vmatprep.subr.mxu0 0.0
    %375 = vmatpush1.msra.mxu0 0.0
    %376 = vmatprep.subr.mxu0 0.0
    %377 = vmatpush1.msra.mxu0 0.0
    %378 = vmatprep.subr.mxu0 0.0
    %379 = vmatpush1.msra.mxu0 0.0
    %380 = vmatprep.subr.mxu0 0.0
    %381 = vmatpush1.msra.mxu0 0.0
    %382 = vmatprep.subr.mxu0 0.0
    %383 = vmatpush1.msra.mxu0 0.0
    %384 = vmatprep.subr.mxu0 0.0
    %385 = vmatpush1.msra.mxu0 0.0
    %386 = vmatprep.subr.mxu0 0.0
    %387 = vmatpush1.msra.mxu0 0.0
    %388 = vmatprep.subr.mxu0 0.0
    %389 = vmatpush1.msra.mxu0 0.0
    %390 = vmatprep.subr.mxu0 0.0
    %391 = vmatpush1.msra.mxu0 %v362
    %392 = vmatprep.subr.mxu0 0.0
    %393 = vmatpush1.msra.mxu0 %v361
    %394 = vmatprep.subr.mxu0 0.0
    %395 = vmatpush1.msra.mxu0 %v360
    %396 = vmatprep.subr.mxu0 0.0
    %397 = vmatpush1.msra.mxu0 %v359
    %398 = vmatprep.subr.mxu0 0.0
    %399 = vmatpush2.msra.mxu0 0.0
    %400 = vmatprep.subr.mxu0 0.0
    %401 = vmatpush2.msra.mxu0 0.0
    %402 = vmatprep.subr.mxu0 0.0
    %403 = vmatpush2.msra.mxu0 0.0
    %404 = vmatprep.subr.mxu0 0.0
    %405 = vmatpush2.msra.mxu0 0.0
    %406 = vmatprep.subr.mxu0 0.0
    %407 = vmatpush2.msra.mxu0 0.0
    %408 = vmatprep.subr.mxu0 0.0
    %409 = vmatpush2.msra.mxu0 0.0
    %410 = vmatprep.subr.mxu0 0.0
    %411 = vmatpush2.msra.mxu0 0.0
    %412 = vmatprep.subr.mxu0 0.0
    %413 = vmatpush2.msra.mxu0 0.0
    %414 = vmatprep.subr.mxu0 0.0
    %415 = vmatpush2.msra.mxu0 0.0
    %416 = vmatprep.subr.mxu0 0.0
    %417 = vmatpush2.msra.mxu0 0.0
    %418 = vmatprep.subr.mxu0 0.0
    %419 = vmatpush2.msra.mxu0 0.0
    %420 = vmatprep.subr.mxu0 0.0
    %421 = vmatpush2.msra.mxu0 0.0
    %422 = vmatprep.subr.mxu0 0.0
    %423 = vmatpush2.msra.mxu0 0.0
    %424 = vmatprep.subr.mxu0 0.0
    %425 = vmatpush2.msra.mxu0 0.0
    %426 = vmatprep.subr.mxu0 0.0
    %427 = vmatpush2.msra.mxu0 0.0
    %428 = vmatprep.subr.mxu0 0.0
    %429 = vmatpush2.msra.mxu0 0.0
    %430 = vmatprep.mubr.f32.mxu0 0.0
    %431 = vmatmul.mubr.f32.gmra.mxu0 %v364
    %v432 = vpop.f32.mrf.mxu0
    %v433 = vadd.f32 0.0, %v432
    %v434 = vpop.f32.mrf.mxu0
    %435 = vdwg.mxu0
    %v436 = vstv %s69
    %v437 = vmul.f32 %v436, %v433
    %v438 = vld [vmem:[#allocation6 + $0x5] sm:$0x1]
    %v439 = vlaneseq
    %v440 = vshrl.u32 %v439, 7
    %v441 = vsub.s32 0, %v440
    %v442 = vrot.slane %v438, %v441
    %v443 = vadd.f32 %v437, %v442
    %v444 = vmax.f32 %v443, 0.0
    %s445 = scalar_lea.vmem [#allocation3], 128
    %v446 = vld [vmem:[%s445] sm:$0xff]
    %v447 = vld [vmem:[%s445 + $0x8] sm:$0xff]
    %v448 = vld [vmem:[%s445 + $0x10] sm:$0xff]
    %v449 = vld [vmem:[%s445 + $0x18] sm:$0xff]
    %v451 = vsel %vm80, %v444, 0
    %453 = vmatprep.subr.mxu0 0.0
    %454 = vmatpush1.msra.mxu0 0.0
    %455 = vmatprep.subr.mxu0 0.0
    %456 = vmatpush1.msra.mxu0 0.0
    %457 = vmatprep.subr.mxu0 0.0
    %458 = vmatpush1.msra.mxu0 0.0
    %459 = vmatprep.subr.mxu0 0.0
    %460 = vmatpush1.msra.mxu0 0.0
    %461 = vmatprep.subr.mxu0 0.0
    %462 = vmatpush1.msra.mxu0 0.0
    %463 = vmatprep.subr.mxu0 0.0
    %464 = vmatpush1.msra.mxu0 0.0
    %465 = vmatprep.subr.mxu0 0.0
    %466 = vmatpush1.msra.mxu0 0.0
    %467 = vmatprep.subr.mxu0 0.0
    %468 = vmatpush1.msra.mxu0 0.0
    %469 = vmatprep.subr.mxu0 0.0
    %470 = vmatpush1.msra.mxu0 0.0
    %471 = vmatprep.subr.mxu0 0.0
    %472 = vmatpush1.msra.mxu0 0.0
    %473 = vmatprep.subr.mxu0 0.0
    %474 = vmatpush1.msra.mxu0 0.0
    %475 = vmatprep.subr.mxu0 0.0
    %476 = vmatpush1.msra.mxu0 0.0
    %477 = vmatprep.subr.mxu0 0.0
    %478 = vmatpush1.msra.mxu0 %v449
    %479 = vmatprep.subr.mxu0 0.0
    %480 = vmatpush1.msra.mxu0 %v448
    %481 = vmatprep.subr.mxu0 0.0
    %482 = vmatpush1.msra.mxu0 %v447
    %483 = vmatprep.subr.mxu0 0.0
    %484 = vmatpush1.msra.mxu0 %v446
    %485 = vmatprep.subr.mxu0 0.0
    %486 = vmatpush2.msra.mxu0 0.0
    %487 = vmatprep.subr.mxu0 0.0
    %488 = vmatpush2.msra.mxu0 0.0
    %489 = vmatprep.subr.mxu0 0.0
    %490 = vmatpush2.msra.mxu0 0.0
    %491 = vmatprep.subr.mxu0 0.0
    %492 = vmatpush2.msra.mxu0 0.0
    %493 = vmatprep.subr.mxu0 0.0
    %494 = vmatpush2.msra.mxu0 0.0
    %495 = vmatprep.subr.mxu0 0.0
    %496 = vmatpush2.msra.mxu0 0.0
    %497 = vmatprep.subr.mxu0 0.0
    %498 = vmatpush2.msra.mxu0 0.0
    %499 = vmatprep.subr.mxu0 0.0
    %500 = vmatpush2.msra.mxu0 0.0
    %501 = vmatprep.subr.mxu0 0.0
    %502 = vmatpush2.msra.mxu0 0.0
    %503 = vmatprep.subr.mxu0 0.0
    %504 = vmatpush2.msra.mxu0 0.0
    %505 = vmatprep.subr.mxu0 0.0
    %506 = vmatpush2.msra.mxu0 0.0
    %507 = vmatprep.subr.mxu0 0.0
    %508 = vmatpush2.msra.mxu0 0.0
    %509 = vmatprep.subr.mxu0 0.0
    %510 = vmatpush2.msra.mxu0 0.0
    %511 = vmatprep.subr.mxu0 0.0
    %512 = vmatpush2.msra.mxu0 0.0
    %513 = vmatprep.subr.mxu0 0.0
    %514 = vmatpush2.msra.mxu0 0.0
    %515 = vmatprep.subr.mxu0 0.0
    %516 = vmatpush2.msra.mxu0 0.0
    %517 = vmatprep.mubr.f32.mxu0 0.0
    %518 = vmatmul.mubr.f32.gmra.mxu0 %v451
    %v519 = vpop.f32.mrf.mxu0
    %v520 = vadd.f32 0.0, %v519
    %v521 = vpop.f32.mrf.mxu0
    %522 = vdwg.mxu0
    %v523 = vmul.f32 %v436, %v520
    %v524 = vld [vmem:[#allocation6 + $0x6] sm:$0x1]
    %v525 = vlaneseq
    %v526 = vshrl.u32 %v525, 7
    %v527 = vsub.s32 0, %v526
    %v528 = vrot.slane %v524, %v527
    %v529 = vadd.f32 %v523, %v528
    %v530 = vmax.f32 %v529, 0.0
    %v531 = vld [vmem:[#allocation8] sm:$0xff]
    %v532 = vld [vmem:[#allocation8 + $0x8] sm:$0xff]
    %v533 = vld [vmem:[#allocation8 + $0x10] sm:$0xff]
    %v534 = vld [vmem:[#allocation8 + $0x18] sm:$0xff]
    %v535 = vld [vmem:[%s6] sm:$0x1]
    %v537 = vlaneseq
    %v538 = vshrl.u32 %v537, 7
    %v539 = vsub.s32 0, %v538
    %v540 = vrot.slane %v535, %v539
    %v543 = vsel %vm80, %v530, 0
    %545 = vmatprep.subr.mxu0 0.0
    %546 = vmatpush1.msra.mxu0 0.0
    %547 = vmatprep.subr.mxu0 0.0
    %548 = vmatpush1.msra.mxu0 0.0
    %549 = vmatprep.subr.mxu0 0.0
    %550 = vmatpush1.msra.mxu0 0.0
    %551 = vmatprep.subr.mxu0 0.0
    %552 = vmatpush1.msra.mxu0 0.0
    %553 = vmatprep.subr.mxu0 0.0
    %554 = vmatpush1.msra.mxu0 0.0
    %555 = vmatprep.subr.mxu0 0.0
    %556 = vmatpush1.msra.mxu0 0.0
    %557 = vmatprep.subr.mxu0 0.0
    %558 = vmatpush1.msra.mxu0 0.0
    %559 = vmatprep.subr.mxu0 0.0
    %560 = vmatpush1.msra.mxu0 0.0
    %561 = vmatprep.subr.mxu0 0.0
    %562 = vmatpush1.msra.mxu0 0.0
    %563 = vmatprep.subr.mxu0 0.0
    %564 = vmatpush1.msra.mxu0 0.0
    %565 = vmatprep.subr.mxu0 0.0
    %566 = vmatpush1.msra.mxu0 0.0
    %567 = vmatprep.subr.mxu0 0.0
    %568 = vmatpush1.msra.mxu0 0.0
    %569 = vmatprep.subr.mxu0 0.0
    %570 = vmatpush1.msra.mxu0 %v534
    %571 = vmatprep.subr.mxu0 0.0
    %572 = vmatpush1.msra.mxu0 %v533
    %573 = vmatprep.subr.mxu0 0.0
    %574 = vmatpush1.msra.mxu0 %v532
    %575 = vmatprep.subr.mxu0 0.0
    %576 = vmatpush1.msra.mxu0 %v531
    %577 = vmatprep.subr.mxu0 0.0
    %578 = vmatpush2.msra.mxu0 0.0
    %579 = vmatprep.subr.mxu0 0.0
    %580 = vmatpush2.msra.mxu0 0.0
    %581 = vmatprep.subr.mxu0 0.0
    %582 = vmatpush2.msra.mxu0 0.0
    %583 = vmatprep.subr.mxu0 0.0
    %584 = vmatpush2.msra.mxu0 0.0
    %585 = vmatprep.subr.mxu0 0.0
    %586 = vmatpush2.msra.mxu0 0.0
    %587 = vmatprep.subr.mxu0 0.0
    %588 = vmatpush2.msra.mxu0 0.0
    %589 = vmatprep.subr.mxu0 0.0
    %590 = vmatpush2.msra.mxu0 0.0
    %591 = vmatprep.subr.mxu0 0.0
    %592 = vmatpush2.msra.mxu0 0.0
    %593 = vmatprep.subr.mxu0 0.0
    %594 = vmatpush2.msra.mxu0 0.0
    %595 = vmatprep.subr.mxu0 0.0
    %596 = vmatpush2.msra.mxu0 0.0
    %597 = vmatprep.subr.mxu0 0.0
    %598 = vmatpush2.msra.mxu0 0.0
    %599 = vmatprep.subr.mxu0 0.0
    %600 = vmatpush2.msra.mxu0 0.0
    %601 = vmatprep.subr.mxu0 0.0
    %602 = vmatpush2.msra.mxu0 0.0
    %603 = vmatprep.subr.mxu0 0.0
    %604 = vmatpush2.msra.mxu0 0.0
    %605 = vmatprep.subr.mxu0 0.0
    %606 = vmatpush2.msra.mxu0 0.0
    %607 = vmatprep.subr.mxu0 0.0
    %608 = vmatpush2.msra.mxu0 0.0
    %609 = vmatprep.mubr.f32.mxu0 0.0
    %610 = vmatmul.mubr.f32.gmra.mxu0 %v543
    %v611 = vpop.f32.mrf.mxu0
    %v612 = vadd.f32 %v540, %v611
    %v613 = vpop.f32.mrf.mxu0
    %614 = vdwg.mxu0
    %v615 = vsub.f32 0.0, %v612
    %v616 = vmul.f32 %v615, 1.442695
    %v617 = vpow.pop %v616
    %v618 = vadd.f32 %v617, 1.0
    %v619 = vrcp.pop %v618
    %v620 = vld [vmem:[#allocation6 + $0xd] sm:$0x1]
    %v621 = vlaneseq
    %v622 = vshrl.u32 %v621, 7
    %v623 = vsub.s32 0, %v622
    %v624 = vrot.slane %v620, %v623
    %v625 = vmul.f32 %v619, %v624
    %627 = vrot.lane.b32.xlu0 %v625, 64
    %v628 = vpop.permute.xlu0 %627
    %v630 = vadd.f32 %v612, %v628
    %v631 = vtanh.pop %v630
    %v632 = vsub.f32 1.0, %v619
    %634 = vrot.lane.b32.xlu0 %v631, 96
    %v635 = vpop.permute.xlu0 %634
    %v637 = vmul.f32 %v632, %v635
    %s638 = scalar_lea.vmem [#allocation8], 32
    %v639 = vld [vmem:[%s638] sm:$0xff]
    %v640 = vld [vmem:[%s638 + $0x8] sm:$0xff]
    %v641 = vld [vmem:[%s638 + $0x10] sm:$0xff]
    %v642 = vld [vmem:[%s638 + $0x18] sm:$0xff]
    %s643 = scalar_lea.vmem %s6, 1
    %v644 = vld [vmem:[%s643] sm:$0x1]
    %v646 = vlaneseq
    %v647 = vshrl.u32 %v646, 7
    %v648 = vsub.s32 0, %v647
    %v649 = vrot.slane %v644, %v648
    %652 = vrot.lane.b32.xlu0 %v637, 96
    %v653 = vpop.permute.xlu0 %652
    %v654 = vsel %vm80, %v653, 0
    %656 = vmatprep.subr.mxu0 0.0
    %657 = vmatpush1.msra.mxu0 0.0
    %658 = vmatprep.subr.mxu0 0.0
    %659 = vmatpush1.msra.mxu0 0.0
    %660 = vmatprep.subr.mxu0 0.0
    %661 = vmatpush1.msra.mxu0 0.0
    %662 = vmatprep.subr.mxu0 0.0
    %663 = vmatpush1.msra.mxu0 0.0
    %664 = vmatprep.subr.mxu0 0.0
    %665 = vmatpush1.msra.mxu0 0.0
    %666 = vmatprep.subr.mxu0 0.0
    %667 = vmatpush1.msra.mxu0 0.0
    %668 = vmatprep.subr.mxu0 0.0
    %669 = vmatpush1.msra.mxu0 0.0
    %670 = vmatprep.subr.mxu0 0.0
    %671 = vmatpush1.msra.mxu0 0.0
    %672 = vmatprep.subr.mxu0 0.0
    %673 = vmatpush1.msra.mxu0 0.0
    %674 = vmatprep.subr.mxu0 0.0
    %675 = vmatpush1.msra.mxu0 0.0
    %676 = vmatprep.subr.mxu0 0.0
    %677 = vmatpush1.msra.mxu0 0.0
    %678 = vmatprep.subr.mxu0 0.0
    %679 = vmatpush1.msra.mxu0 0.0
    %680 = vmatprep.subr.mxu0 0.0
    %681 = vmatpush1.msra.mxu0 %v642
    %682 = vmatprep.subr.mxu0 0.0
    %683 = vmatpush1.msra.mxu0 %v641
    %684 = vmatprep.subr.mxu0 0.0
    %685 = vmatpush1.msra.mxu0 %v640
    %686 = vmatprep.subr.mxu0 0.0
    %687 = vmatpush1.msra.mxu0 %v639
    %688 = vmatprep.subr.mxu0 0.0
    %689 = vmatpush2.msra.mxu0 0.0
    %690 = vmatprep.subr.mxu0 0.0
    %691 = vmatpush2.msra.mxu0 0.0
    %692 = vmatprep.subr.mxu0 0.0
    %693 = vmatpush2.msra.mxu0 0.0
    %694 = vmatprep.subr.mxu0 0.0
    %695 = vmatpush2.msra.mxu0 0.0
    %696 = vmatprep.subr.mxu0 0.0
    %697 = vmatpush2.msra.mxu0 0.0
    %698 = vmatprep.subr.mxu0 0.0
    %699 = vmatpush2.msra.mxu0 0.0
    %700 = vmatprep.subr.mxu0 0.0
    %701 = vmatpush2.msra.mxu0 0.0
    %702 = vmatprep.subr.mxu0 0.0
    %703 = vmatpush2.msra.mxu0 0.0
    %704 = vmatprep.subr.mxu0 0.0
    %705 = vmatpush2.msra.mxu0 0.0
    %706 = vmatprep.subr.mxu0 0.0
    %707 = vmatpush2.msra.mxu0 0.0
    %708 = vmatprep.subr.mxu0 0.0
    %709 = vmatpush2.msra.mxu0 0.0
    %710 = vmatprep.subr.mxu0 0.0
    %711 = vmatpush2.msra.mxu0 0.0
    %712 = vmatprep.subr.mxu0 0.0
    %713 = vmatpush2.msra.mxu0 0.0
    %714 = vmatprep.subr.mxu0 0.0
    %715 = vmatpush2.msra.mxu0 0.0
    %716 = vmatprep.subr.mxu0 0.0
    %717 = vmatpush2.msra.mxu0 0.0
    %718 = vmatprep.subr.mxu0 0.0
    %719 = vmatpush2.msra.mxu0 0.0
    %720 = vmatprep.mubr.f32.mxu0 0.0
    %721 = vmatmul.mubr.f32.gmra.mxu0 %v654
    %v722 = vpop.f32.mrf.mxu0
    %v723 = vadd.f32 %v649, %v722
    %v724 = vpop.f32.mrf.mxu0
    %725 = vdwg.mxu0
    %v726 = vsub.f32 0.0, %v723
    %v727 = vmul.f32 %v726, 1.442695
    %v728 = vpow.pop %v727
    %v729 = vadd.f32 %v728, 1.0
    %v730 = vrcp.pop %v729
    %v731 = vld [vmem:[#allocation6 + $0xe] sm:$0x1]
    %v732 = vlaneseq
    %v733 = vshrl.u32 %v732, 7
    %v734 = vsub.s32 0, %v733
    %v735 = vrot.slane %v731, %v734
    %v736 = vmul.f32 %v730, %v735
    %738 = vrot.lane.b32.xlu0 %v736, 64
    %v739 = vpop.permute.xlu0 %738
    %v741 = vadd.f32 %v723, %v739
    %v742 = vtanh.pop %v741
    %v743 = vsub.f32 1.0, %v730
    %745 = vrot.lane.b32.xlu0 %v742, 96
    %v746 = vpop.permute.xlu0 %745
    %v748 = vmul.f32 %v743, %v746
    %s749 = scalar_lea.vmem [#allocation3], 224
    %v750 = vld [vmem:[%s749] sm:$0xff]
    %v751 = vld [vmem:[%s749 + $0x8] sm:$0xff]
    %v752 = vld [vmem:[%s749 + $0x10] sm:$0xff]
    %v753 = vld [vmem:[%s749 + $0x18] sm:$0xff]
    %s754 = scalar_lea.vmem [#allocation3], 256
    %v755 = vld [vmem:[%s754] sm:$0xff]
    %v756 = vld [vmem:[%s754 + $0x8] sm:$0xff]
    %v757 = vld [vmem:[%s754 + $0x10] sm:$0xff]
    %v758 = vld [vmem:[%s754 + $0x18] sm:$0xff]
    %v760 = vsel %vm80, %v355, 0
    %762 = vmatprep.subr.mxu0 0.0
    %763 = vmatpush1.msra.mxu0 0.0
    %764 = vmatprep.subr.mxu0 0.0
    %765 = vmatpush1.msra.mxu0 0.0
    %766 = vmatprep.subr.mxu0 0.0
    %767 = vmatpush1.msra.mxu0 0.0
    %768 = vmatprep.subr.mxu0 0.0
    %769 = vmatpush1.msra.mxu0 0.0
    %770 = vmatprep.subr.mxu0 0.0
    %771 = vmatpush1.msra.mxu0 0.0
    %772 = vmatprep.subr.mxu0 0.0
    %773 = vmatpush1.msra.mxu0 0.0
    %774 = vmatprep.subr.mxu0 0.0
    %775 = vmatpush1.msra.mxu0 0.0
    %776 = vmatprep.subr.mxu0 0.0
    %777 = vmatpush1.msra.mxu0 0.0
    %778 = vmatprep.subr.mxu0 0.0
    %779 = vmatpush1.msra.mxu0 0.0
    %780 = vmatprep.subr.mxu0 0.0
    %781 = vmatpush1.msra.mxu0 0.0
    %782 = vmatprep.subr.mxu0 0.0
    %783 = vmatpush1.msra.mxu0 0.0
    %784 = vmatprep.subr.mxu0 0.0
    %785 = vmatpush1.msra.mxu0 0.0
    %786 = vmatprep.subr.mxu0 0.0
    %787 = vmatpush1.msra.mxu0 %v758
    %788 = vmatprep.subr.mxu0 0.0
    %789 = vmatpush1.msra.mxu0 %v757
    %790 = vmatprep.subr.mxu0 0.0
    %791 = vmatpush1.msra.mxu0 %v756
    %792 = vmatprep.subr.mxu0 0.0
    %793 = vmatpush1.msra.mxu0 %v755
    %794 = vmatprep.subr.mxu0 0.0
    %795 = vmatpush2.msra.mxu0 0.0
    %796 = vmatprep.subr.mxu0 0.0
    %797 = vmatpush2.msra.mxu0 0.0
    %798 = vmatprep.subr.mxu0 0.0
    %799 = vmatpush2.msra.mxu0 0.0
    %800 = vmatprep.subr.mxu0 0.0
    %801 = vmatpush2.msra.mxu0 0.0
    %802 = vmatprep.subr.mxu0 0.0
    %803 = vmatpush2.msra.mxu0 0.0
    %804 = vmatprep.subr.mxu0 0.0
    %805 = vmatpush2.msra.mxu0 0.0
    %806 = vmatprep.subr.mxu0 0.0
    %807 = vmatpush2.msra.mxu0 0.0
    %808 = vmatprep.subr.mxu0 0.0
    %809 = vmatpush2.msra.mxu0 0.0
    %810 = vmatprep.subr.mxu0 0.0
    %811 = vmatpush2.msra.mxu0 0.0
    %812 = vmatprep.subr.mxu0 0.0
    %813 = vmatpush2.msra.mxu0 0.0
    %814 = vmatprep.subr.mxu0 0.0
    %815 = vmatpush2.msra.mxu0 0.0
    %816 = vmatprep.subr.mxu0 0.0
    %817 = vmatpush2.msra.mxu0 0.0
    %818 = vmatprep.subr.mxu0 0.0
    %819 = vmatpush2.msra.mxu0 0.0
    %820 = vmatprep.subr.mxu0 0.0
    %821 = vmatpush2.msra.mxu0 0.0
    %822 = vmatprep.subr.mxu0 0.0
    %823 = vmatpush2.msra.mxu0 0.0
    %824 = vmatprep.subr.mxu0 0.0
    %825 = vmatpush2.msra.mxu0 0.0
    %826 = vmatprep.mubr.f32.mxu0 0.0
    %827 = vmatmul.mubr.f32.gmra.mxu0 %v760
    %v828 = vpop.f32.mrf.mxu0
    %v829 = vadd.f32 0.0, %v828
    %v830 = vpop.f32.mrf.mxu0
    %831 = vdwg.mxu0
    %833 = vrot.lane.b32.xlu0 %v748, 96
    %v834 = vpop.permute.xlu0 %833
    %v835 = vsel %vm80, %v834, 0
    %837 = vmatprep.subr.mxu0 0.0
    %838 = vmatpush1.msra.mxu0 0.0
    %839 = vmatprep.subr.mxu0 0.0
    %840 = vmatpush1.msra.mxu0 0.0
    %841 = vmatprep.subr.mxu0 0.0
    %842 = vmatpush1.msra.mxu0 0.0
    %843 = vmatprep.subr.mxu0 0.0
    %844 = vmatpush1.msra.mxu0 0.0
    %845 = vmatprep.subr.mxu0 0.0
    %846 = vmatpush1.msra.mxu0 0.0
    %847 = vmatprep.subr.mxu0 0.0
    %848 = vmatpush1.msra.mxu0 0.0
    %849 = vmatprep.subr.mxu0 0.0
    %850 = vmatpush1.msra.mxu0 0.0
    %851 = vmatprep.subr.mxu0 0.0
    %852 = vmatpush1.msra.mxu0 0.0
    %853 = vmatprep.subr.mxu0 0.0
    %854 = vmatpush1.msra.mxu0 0.0
    %855 = vmatprep.subr.mxu0 0.0
    %856 = vmatpush1.msra.mxu0 0.0
    %857 = vmatprep.subr.mxu0 0.0
    %858 = vmatpush1.msra.mxu0 0.0
    %859 = vmatprep.subr.mxu0 0.0
    %860 = vmatpush1.msra.mxu0 0.0
    %861 = vmatprep.subr.mxu0 0.0
    %862 = vmatpush1.msra.mxu0 %v753
    %863 = vmatprep.subr.mxu0 0.0
    %864 = vmatpush1.msra.mxu0 %v752
    %865 = vmatprep.subr.mxu0 0.0
    %866 = vmatpush1.msra.mxu0 %v751
    %867 = vmatprep.subr.mxu0 0.0
    %868 = vmatpush1.msra.mxu0 %v750
    %869 = vmatprep.subr.mxu0 0.0
    %870 = vmatpush2.msra.mxu0 0.0
    %871 = vmatprep.subr.mxu0 0.0
    %872 = vmatpush2.msra.mxu0 0.0
    %873 = vmatprep.subr.mxu0 0.0
    %874 = vmatpush2.msra.mxu0 0.0
    %875 = vmatprep.subr.mxu0 0.0
    %876 = vmatpush2.msra.mxu0 0.0
    %877 = vmatprep.subr.mxu0 0.0
    %878 = vmatpush2.msra.mxu0 0.0
    %879 = vmatprep.subr.mxu0 0.0
    %880 = vmatpush2.msra.mxu0 0.0
    %881 = vmatprep.subr.mxu0 0.0
    %882 = vmatpush2.msra.mxu0 0.0
    %883 = vmatprep.subr.mxu0 0.0
    %884 = vmatpush2.msra.mxu0 0.0
    %885 = vmatprep.subr.mxu0 0.0
    %886 = vmatpush2.msra.mxu0 0.0
    %887 = vmatprep.subr.mxu0 0.0
    %888 = vmatpush2.msra.mxu0 0.0
    %889 = vmatprep.subr.mxu0 0.0
    %890 = vmatpush2.msra.mxu0 0.0
    %891 = vmatprep.subr.mxu0 0.0
    %892 = vmatpush2.msra.mxu0 0.0
    %893 = vmatprep.subr.mxu0 0.0
    %894 = vmatpush2.msra.mxu0 0.0
    %895 = vmatprep.subr.mxu0 0.0
    %896 = vmatpush2.msra.mxu0 0.0
    %897 = vmatprep.subr.mxu0 0.0
    %898 = vmatpush2.msra.mxu0 0.0
    %899 = vmatprep.subr.mxu0 0.0
    %900 = vmatpush2.msra.mxu0 0.0
    %901 = vmatprep.mubr.f32.mxu0 0.0
    %902 = vmatmul.mubr.f32.gmra.mxu0 %v835
    %v903 = vpop.f32.mrf.mxu0
    %v904 = vadd.f32 %v829, %v903
    %v905 = vpop.f32.mrf.mxu0
    %906 = vdwg.mxu0
    %v907 = vld [vmem:[#allocation6 + $0x9] sm:$0x1]
    %v908 = vlaneseq
    %v909 = vshrl.u32 %v908, 7
    %v910 = vsub.s32 0, %v909
    %v911 = vrot.slane %v907, %v910
    %v912 = vadd.f32 %v904, %v911
    %v913 = vmax.f32 %v912, 0.0
    %s914 = scalar_lea.vmem [#allocation3], 160
    %v915 = vld [vmem:[%s914] sm:$0xff]
    %v916 = vld [vmem:[%s914 + $0x8] sm:$0xff]
    %v917 = vld [vmem:[%s914 + $0x10] sm:$0xff]
    %v918 = vld [vmem:[%s914 + $0x18] sm:$0xff]
    %v920 = vsel %vm80, %v913, 0
    %922 = vmatprep.subr.mxu0 0.0
    %923 = vmatpush1.msra.mxu0 0.0
    %924 = vmatprep.subr.mxu0 0.0
    %925 = vmatpush1.msra.mxu0 0.0
    %926 = vmatprep.subr.mxu0 0.0
    %927 = vmatpush1.msra.mxu0 0.0
    %928 = vmatprep.subr.mxu0 0.0
    %929 = vmatpush1.msra.mxu0 0.0
    %930 = vmatprep.subr.mxu0 0.0
    %931 = vmatpush1.msra.mxu0 0.0
    %932 = vmatprep.subr.mxu0 0.0
    %933 = vmatpush1.msra.mxu0 0.0
    %934 = vmatprep.subr.mxu0 0.0
    %935 = vmatpush1.msra.mxu0 0.0
    %936 = vmatprep.subr.mxu0 0.0
    %937 = vmatpush1.msra.mxu0 0.0
    %938 = vmatprep.subr.mxu0 0.0
    %939 = vmatpush1.msra.mxu0 0.0
    %940 = vmatprep.subr.mxu0 0.0
    %941 = vmatpush1.msra.mxu0 0.0
    %942 = vmatprep.subr.mxu0 0.0
    %943 = vmatpush1.msra.mxu0 0.0
    %944 = vmatprep.subr.mxu0 0.0
    %945 = vmatpush1.msra.mxu0 0.0
    %946 = vmatprep.subr.mxu0 0.0
    %947 = vmatpush1.msra.mxu0 %v918
    %948 = vmatprep.subr.mxu0 0.0
    %949 = vmatpush1.msra.mxu0 %v917
    %950 = vmatprep.subr.mxu0 0.0
    %951 = vmatpush1.msra.mxu0 %v916
    %952 = vmatprep.subr.mxu0 0.0
    %953 = vmatpush1.msra.mxu0 %v915
    %954 = vmatprep.subr.mxu0 0.0
    %955 = vmatpush2.msra.mxu0 0.0
    %956 = vmatprep.subr.mxu0 0.0
    %957 = vmatpush2.msra.mxu0 0.0
    %958 = vmatprep.subr.mxu0 0.0
    %959 = vmatpush2.msra.mxu0 0.0
    %960 = vmatprep.subr.mxu0 0.0
    %961 = vmatpush2.msra.mxu0 0.0
    %962 = vmatprep.subr.mxu0 0.0
    %963 = vmatpush2.msra.mxu0 0.0
    %964 = vmatprep.subr.mxu0 0.0
    %965 = vmatpush2.msra.mxu0 0.0
    %966 = vmatprep.subr.mxu0 0.0
    %967 = vmatpush2.msra.mxu0 0.0
    %968 = vmatprep.subr.mxu0 0.0
    %969 = vmatpush2.msra.mxu0 0.0
    %970 = vmatprep.subr.mxu0 0.0
    %971 = vmatpush2.msra.mxu0 0.0
    %972 = vmatprep.subr.mxu0 0.0
    %973 = vmatpush2.msra.mxu0 0.0
    %974 = vmatprep.subr.mxu0 0.0
    %975 = vmatpush2.msra.mxu0 0.0
    %976 = vmatprep.subr.mxu0 0.0
    %977 = vmatpush2.msra.mxu0 0.0
    %978 = vmatprep.subr.mxu0 0.0
    %979 = vmatpush2.msra.mxu0 0.0
    %980 = vmatprep.subr.mxu0 0.0
    %981 = vmatpush2.msra.mxu0 0.0
    %982 = vmatprep.subr.mxu0 0.0
    %983 = vmatpush2.msra.mxu0 0.0
    %984 = vmatprep.subr.mxu0 0.0
    %985 = vmatpush2.msra.mxu0 0.0
    %986 = vmatprep.mubr.f32.mxu0 0.0
    %987 = vmatmul.mubr.f32.gmra.mxu0 %v920
    %v988 = vpop.f32.mrf.mxu0
    %v989 = vadd.f32 0.0, %v988
    %v990 = vpop.f32.mrf.mxu0
    %991 = vdwg.mxu0
    %v992 = vmul.f32 %v436, %v989
    %v993 = vld [vmem:[#allocation6 + $0x7] sm:$0x1]
    %v994 = vlaneseq
    %v995 = vshrl.u32 %v994, 7
    %v996 = vsub.s32 0, %v995
    %v997 = vrot.slane %v993, %v996
    %v998 = vadd.f32 %v992, %v997
    %v999 = vmax.f32 %v998, 0.0
    %s1000 = scalar_lea.vmem [#allocation3], 192
    %v1001 = vld [vmem:[%s1000] sm:$0xff]
    %v1002 = vld [vmem:[%s1000 + $0x8] sm:$0xff]
    %v1003 = vld [vmem:[%s1000 + $0x10] sm:$0xff]
    %v1004 = vld [vmem:[%s1000 + $0x18] sm:$0xff]
    %v1006 = vsel %vm80, %v999, 0
    %1008 = vmatprep.subr.mxu0 0.0
    %1009 = vmatpush1.msra.mxu0 0.0
    %1010 = vmatprep.subr.mxu0 0.0
    %1011 = vmatpush1.msra.mxu0 0.0
    %1012 = vmatprep.subr.mxu0 0.0
    %1013 = vmatpush1.msra.mxu0 0.0
    %1014 = vmatprep.subr.mxu0 0.0
    %1015 = vmatpush1.msra.mxu0 0.0
    %1016 = vmatprep.subr.mxu0 0.0
    %1017 = vmatpush1.msra.mxu0 0.0
    %1018 = vmatprep.subr.mxu0 0.0
    %1019 = vmatpush1.msra.mxu0 0.0
    %1020 = vmatprep.subr.mxu0 0.0
    %1021 = vmatpush1.msra.mxu0 0.0
    %1022 = vmatprep.subr.mxu0 0.0
    %1023 = vmatpush1.msra.mxu0 0.0
    %1024 = vmatprep.subr.mxu0 0.0
    %1025 = vmatpush1.msra.mxu0 0.0
    %1026 = vmatprep.subr.mxu0 0.0
    %1027 = vmatpush1.msra.mxu0 0.0
    %1028 = vmatprep.subr.mxu0 0.0
    %1029 = vmatpush1.msra.mxu0 0.0
    %1030 = vmatprep.subr.mxu0 0.0
    %1031 = vmatpush1.msra.mxu0 0.0
    %1032 = vmatprep.subr.mxu0 0.0
    %1033 = vmatpush1.msra.mxu0 %v1004
    %1034 = vmatprep.subr.mxu0 0.0
    %1035 = vmatpush1.msra.mxu0 %v1003
    %1036 = vmatprep.subr.mxu0 0.0
    %1037 = vmatpush1.msra.mxu0 %v1002
    %1038 = vmatprep.subr.mxu0 0.0
    %1039 = vmatpush1.msra.mxu0 %v1001
    %1040 = vmatprep.subr.mxu0 0.0
    %1041 = vmatpush2.msra.mxu0 0.0
    %1042 = vmatprep.subr.mxu0 0.0
    %1043 = vmatpush2.msra.mxu0 0.0
    %1044 = vmatprep.subr.mxu0 0.0
    %1045 = vmatpush2.msra.mxu0 0.0
    %1046 = vmatprep.subr.mxu0 0.0
    %1047 = vmatpush2.msra.mxu0 0.0
    %1048 = vmatprep.subr.mxu0 0.0
    %1049 = vmatpush2.msra.mxu0 0.0
    %1050 = vmatprep.subr.mxu0 0.0
    %1051 = vmatpush2.msra.mxu0 0.0
    %1052 = vmatprep.subr.mxu0 0.0
    %1053 = vmatpush2.msra.mxu0 0.0
    %1054 = vmatprep.subr.mxu0 0.0
    %1055 = vmatpush2.msra.mxu0 0.0
    %1056 = vmatprep.subr.mxu0 0.0
    %1057 = vmatpush2.msra.mxu0 0.0
    %1058 = vmatprep.subr.mxu0 0.0
    %1059 = vmatpush2.msra.mxu0 0.0
    %1060 = vmatprep.subr.mxu0 0.0
    %1061 = vmatpush2.msra.mxu0 0.0
    %1062 = vmatprep.subr.mxu0 0.0
    %1063 = vmatpush2.msra.mxu0 0.0
    %1064 = vmatprep.subr.mxu0 0.0
    %1065 = vmatpush2.msra.mxu0 0.0
    %1066 = vmatprep.subr.mxu0 0.0
    %1067 = vmatpush2.msra.mxu0 0.0
    %1068 = vmatprep.subr.mxu0 0.0
    %1069 = vmatpush2.msra.mxu0 0.0
    %1070 = vmatprep.subr.mxu0 0.0
    %1071 = vmatpush2.msra.mxu0 0.0
    %1072 = vmatprep.mubr.f32.mxu0 0.0
    %1073 = vmatmul.mubr.f32.gmra.mxu0 %v1006
    %v1074 = vpop.f32.mrf.mxu0
    %v1075 = vadd.f32 0.0, %v1074
    %v1076 = vpop.f32.mrf.mxu0
    %1077 = vdwg.mxu0
    %v1078 = vmul.f32 %v436, %v1075
    %v1079 = vld [vmem:[#allocation6 + $0x8] sm:$0x1]
    %v1080 = vlaneseq
    %v1081 = vshrl.u32 %v1080, 7
    %v1082 = vsub.s32 0, %v1081
    %v1083 = vrot.slane %v1079, %v1082
    %v1084 = vadd.f32 %v1078, %v1083
    %v1085 = vmax.f32 %v1084, 0.0
    %s1086 = scalar_lea.vmem [#allocation8], 64
    %v1087 = vld [vmem:[%s1086] sm:$0xff]
    %v1088 = vld [vmem:[%s1086 + $0x8] sm:$0xff]
    %v1089 = vld [vmem:[%s1086 + $0x10] sm:$0xff]
    %v1090 = vld [vmem:[%s1086 + $0x18] sm:$0xff]
    %s1091 = scalar_lea.vmem %s6, 2
    %v1092 = vld [vmem:[%s1091] sm:$0x1]
    %v1094 = vlaneseq
    %v1095 = vshrl.u32 %v1094, 7
    %v1096 = vsub.s32 0, %v1095
    %v1097 = vrot.slane %v1092, %v1096
    %v1100 = vsel %vm80, %v1085, 0
    %1102 = vmatprep.subr.mxu0 0.0
    %1103 = vmatpush1.msra.mxu0 0.0
    %1104 = vmatprep.subr.mxu0 0.0
    %1105 = vmatpush1.msra.mxu0 0.0
    %1106 = vmatprep.subr.mxu0 0.0
    %1107 = vmatpush1.msra.mxu0 0.0
    %1108 = vmatprep.subr.mxu0 0.0
    %1109 = vmatpush1.msra.mxu0 0.0
    %1110 = vmatprep.subr.mxu0 0.0
    %1111 = vmatpush1.msra.mxu0 0.0
    %1112 = vmatprep.subr.mxu0 0.0
    %1113 = vmatpush1.msra.mxu0 0.0
    %1114 = vmatprep.subr.mxu0 0.0
    %1115 = vmatpush1.msra.mxu0 0.0
    %1116 = vmatprep.subr.mxu0 0.0
    %1117 = vmatpush1.msra.mxu0 0.0
    %1118 = vmatprep.subr.mxu0 0.0
    %1119 = vmatpush1.msra.mxu0 0.0
    %1120 = vmatprep.subr.mxu0 0.0
    %1121 = vmatpush1.msra.mxu0 0.0
    %1122 = vmatprep.subr.mxu0 0.0
    %1123 = vmatpush1.msra.mxu0 0.0
    %1124 = vmatprep.subr.mxu0 0.0
    %1125 = vmatpush1.msra.mxu0 0.0
    %1126 = vmatprep.subr.mxu0 0.0
    %1127 = vmatpush1.msra.mxu0 %v1090
    %1128 = vmatprep.subr.mxu0 0.0
    %1129 = vmatpush1.msra.mxu0 %v1089
    %1130 = vmatprep.subr.mxu0 0.0
    %1131 = vmatpush1.msra.mxu0 %v1088
    %1132 = vmatprep.subr.mxu0 0.0
    %1133 = vmatpush1.msra.mxu0 %v1087
    %1134 = vmatprep.subr.mxu0 0.0
    %1135 = vmatpush2.msra.mxu0 0.0
    %1136 = vmatprep.subr.mxu0 0.0
    %1137 = vmatpush2.msra.mxu0 0.0
    %1138 = vmatprep.subr.mxu0 0.0
    %1139 = vmatpush2.msra.mxu0 0.0
    %1140 = vmatprep.subr.mxu0 0.0
    %1141 = vmatpush2.msra.mxu0 0.0
    %1142 = vmatprep.subr.mxu0 0.0
    %1143 = vmatpush2.msra.mxu0 0.0
    %1144 = vmatprep.subr.mxu0 0.0
    %1145 = vmatpush2.msra.mxu0 0.0
    %1146 = vmatprep.subr.mxu0 0.0
    %1147 = vmatpush2.msra.mxu0 0.0
    %1148 = vmatprep.subr.mxu0 0.0
    %1149 = vmatpush2.msra.mxu0 0.0
    %1150 = vmatprep.subr.mxu0 0.0
    %1151 = vmatpush2.msra.mxu0 0.0
    %1152 = vmatprep.subr.mxu0 0.0
    %1153 = vmatpush2.msra.mxu0 0.0
    %1154 = vmatprep.subr.mxu0 0.0
    %1155 = vmatpush2.msra.mxu0 0.0
    %1156 = vmatprep.subr.mxu0 0.0
    %1157 = vmatpush2.msra.mxu0 0.0
    %1158 = vmatprep.subr.mxu0 0.0
    %1159 = vmatpush2.msra.mxu0 0.0
    %1160 = vmatprep.subr.mxu0 0.0
    %1161 = vmatpush2.msra.mxu0 0.0
    %1162 = vmatprep.subr.mxu0 0.0
    %1163 = vmatpush2.msra.mxu0 0.0
    %1164 = vmatprep.subr.mxu0 0.0
    %1165 = vmatpush2.msra.mxu0 0.0
    %1166 = vmatprep.mubr.f32.mxu0 0.0
    %1167 = vmatmul.mubr.f32.gmra.mxu0 %v1100
    %v1168 = vpop.f32.mrf.mxu0
    %v1169 = vadd.f32 %v1097, %v1168
    %v1170 = vpop.f32.mrf.mxu0
    %1171 = vdwg.mxu0
    %v1172 = vsub.f32 0.0, %v1169
    %v1173 = vmul.f32 %v1172, 1.442695
    %v1174 = vpow.pop %v1173
    %v1175 = vadd.f32 %v1174, 1.0
    %v1176 = vrcp.pop %v1175
    %v1177 = vld [vmem:[#allocation6 + $0xf] sm:$0x1]
    %v1178 = vlaneseq
    %v1179 = vshrl.u32 %v1178, 7
    %v1180 = vsub.s32 0, %v1179
    %v1181 = vrot.slane %v1177, %v1180
    %v1182 = vmul.f32 %v1176, %v1181
    %1184 = vrot.lane.b32.xlu0 %v1182, 64
    %v1185 = vpop.permute.xlu0 %1184
    %v1187 = vadd.f32 %v1169, %v1185
    %v1188 = vtanh.pop %v1187
    %v1189 = vsub.f32 1.0, %v1176
    %1191 = vrot.lane.b32.xlu0 %v1188, 96
    %v1192 = vpop.permute.xlu0 %1191
    %v1194 = vmul.f32 %v1189, %v1192
    %s1195 = scalar_lea.vmem [#allocation8], 96
    %v1196 = vld [vmem:[%s1195] sm:$0xff]
    %v1197 = vld [vmem:[%s1195 + $0x8] sm:$0xff]
    %v1198 = vld [vmem:[%s1195 + $0x10] sm:$0xff]
    %v1199 = vld [vmem:[%s1195 + $0x18] sm:$0xff]
    %s1200 = scalar_lea.vmem %s6, 3
    %v1201 = vld [vmem:[%s1200] sm:$0x1]
    %v1203 = vlaneseq
    %v1204 = vshrl.u32 %v1203, 7
    %v1205 = vsub.s32 0, %v1204
    %v1206 = vrot.slane %v1201, %v1205
    %1209 = vrot.lane.b32.xlu0 %v1194, 96
    %v1210 = vpop.permute.xlu0 %1209
    %v1211 = vsel %vm80, %v1210, 0
    %1213 = vmatprep.subr.mxu0 0.0
    %1214 = vmatpush1.msra.mxu0 0.0
    %1215 = vmatprep.subr.mxu0 0.0
    %1216 = vmatpush1.msra.mxu0 0.0
    %1217 = vmatprep.subr.mxu0 0.0
    %1218 = vmatpush1.msra.mxu0 0.0
    %1219 = vmatprep.subr.mxu0 0.0
    %1220 = vmatpush1.msra.mxu0 0.0
    %1221 = vmatprep.subr.mxu0 0.0
    %1222 = vmatpush1.msra.mxu0 0.0
    %1223 = vmatprep.subr.mxu0 0.0
    %1224 = vmatpush1.msra.mxu0 0.0
    %1225 = vmatprep.subr.mxu0 0.0
    %1226 = vmatpush1.msra.mxu0 0.0
    %1227 = vmatprep.subr.mxu0 0.0
    %1228 = vmatpush1.msra.mxu0 0.0
    %1229 = vmatprep.subr.mxu0 0.0
    %1230 = vmatpush1.msra.mxu0 0.0
    %1231 = vmatprep.subr.mxu0 0.0
    %1232 = vmatpush1.msra.mxu0 0.0
    %1233 = vmatprep.subr.mxu0 0.0
    %1234 = vmatpush1.msra.mxu0 0.0
    %1235 = vmatprep.subr.mxu0 0.0
    %1236 = vmatpush1.msra.mxu0 0.0
    %1237 = vmatprep.subr.mxu0 0.0
    %1238 = vmatpush1.msra.mxu0 %v1199
    %1239 = vmatprep.subr.mxu0 0.0
    %1240 = vmatpush1.msra.mxu0 %v1198
    %1241 = vmatprep.subr.mxu0 0.0
    %1242 = vmatpush1.msra.mxu0 %v1197
    %1243 = vmatprep.subr.mxu0 0.0
    %1244 = vmatpush1.msra.mxu0 %v1196
    %1245 = vmatprep.subr.mxu0 0.0
    %1246 = vmatpush2.msra.mxu0 0.0
    %1247 = vmatprep.subr.mxu0 0.0
    %1248 = vmatpush2.msra.mxu0 0.0
    %1249 = vmatprep.subr.mxu0 0.0
    %1250 = vmatpush2.msra.mxu0 0.0
    %1251 = vmatprep.subr.mxu0 0.0
    %1252 = vmatpush2.msra.mxu0 0.0
    %1253 = vmatprep.subr.mxu0 0.0
    %1254 = vmatpush2.msra.mxu0 0.0
    %1255 = vmatprep.subr.mxu0 0.0
    %1256 = vmatpush2.msra.mxu0 0.0
    %1257 = vmatprep.subr.mxu0 0.0
    %1258 = vmatpush2.msra.mxu0 0.0
    %1259 = vmatprep.subr.mxu0 0.0
    %1260 = vmatpush2.msra.mxu0 0.0
    %1261 = vmatprep.subr.mxu0 0.0
    %1262 = vmatpush2.msra.mxu0 0.0
    %1263 = vmatprep.subr.mxu0 0.0
    %1264 = vmatpush2.msra.mxu0 0.0
    %1265 = vmatprep.subr.mxu0 0.0
    %1266 = vmatpush2.msra.mxu0 0.0
    %1267 = vmatprep.subr.mxu0 0.0
    %1268 = vmatpush2.msra.mxu0 0.0
    %1269 = vmatprep.subr.mxu0 0.0
    %1270 = vmatpush2.msra.mxu0 0.0
    %1271 = vmatprep.subr.mxu0 0.0
    %1272 = vmatpush2.msra.mxu0 0.0
    %1273 = vmatprep.subr.mxu0 0.0
    %1274 = vmatpush2.msra.mxu0 0.0
    %1275 = vmatprep.subr.mxu0 0.0
    %1276 = vmatpush2.msra.mxu0 0.0
    %1277 = vmatprep.mubr.f32.mxu0 0.0
    %1278 = vmatmul.mubr.f32.gmra.mxu0 %v1211
    %v1279 = vpop.f32.mrf.mxu0
    %v1280 = vadd.f32 %v1206, %v1279
    %v1281 = vpop.f32.mrf.mxu0
    %1282 = vdwg.mxu0
    %v1283 = vsub.f32 0.0, %v1280
    %v1284 = vmul.f32 %v1283, 1.442695
    %v1285 = vpow.pop %v1284
    %v1286 = vadd.f32 %v1285, 1.0
    %v1287 = vrcp.pop %v1286
    %v1288 = vld [vmem:[#allocation6 + $0x10] sm:$0x1]
    %v1289 = vlaneseq
    %v1290 = vshrl.u32 %v1289, 7
    %v1291 = vsub.s32 0, %v1290
    %v1292 = vrot.slane %v1288, %v1291
    %v1293 = vmul.f32 %v1287, %v1292
    %1295 = vrot.lane.b32.xlu0 %v1293, 64
    %v1296 = vpop.permute.xlu0 %1295
    %v1298 = vadd.f32 %v1280, %v1296
    %v1299 = vtanh.pop %v1298
    %v1300 = vsub.f32 1.0, %v1287
    %1302 = vrot.lane.b32.xlu0 %v1299, 96
    %v1303 = vpop.permute.xlu0 %1302
    %v1305 = vmul.f32 %v1300, %v1303
    %s1306 = scalar_lea.vmem [#allocation3], 288
    %v1307 = vld [vmem:[%s1306] sm:$0xff]
    %v1308 = vld [vmem:[%s1306 + $0x8] sm:$0xff]
    %v1309 = vld [vmem:[%s1306 + $0x10] sm:$0xff]
    %v1310 = vld [vmem:[%s1306 + $0x18] sm:$0xff]
    %v1311 = vld [vmem:[#allocation6 + $0xa] sm:$0x1]
    %v1312 = vlaneseq
    %v1313 = vshrl.u32 %v1312, 7
    %v1314 = vsub.s32 0, %v1313
    %v1315 = vrot.slane %v1311, %v1314
    %1317 = vrot.lane.b32.xlu0 %v1305, 96
    %v1318 = vpop.permute.xlu0 %1317
    %v1319 = vsel %vm80, %v1318, 0
    %1321 = vmatprep.subr.mxu0 0.0
    %1322 = vmatpush1.msra.mxu0 0.0
    %1323 = vmatprep.subr.mxu0 0.0
    %1324 = vmatpush1.msra.mxu0 0.0
    %1325 = vmatprep.subr.mxu0 0.0
    %1326 = vmatpush1.msra.mxu0 0.0
    %1327 = vmatprep.subr.mxu0 0.0
    %1328 = vmatpush1.msra.mxu0 0.0
    %1329 = vmatprep.subr.mxu0 0.0
    %1330 = vmatpush1.msra.mxu0 0.0
    %1331 = vmatprep.subr.mxu0 0.0
    %1332 = vmatpush1.msra.mxu0 0.0
    %1333 = vmatprep.subr.mxu0 0.0
    %1334 = vmatpush1.msra.mxu0 0.0
    %1335 = vmatprep.subr.mxu0 0.0
    %1336 = vmatpush1.msra.mxu0 0.0
    %1337 = vmatprep.subr.mxu0 0.0
    %1338 = vmatpush1.msra.mxu0 0.0
    %1339 = vmatprep.subr.mxu0 0.0
    %1340 = vmatpush1.msra.mxu0 0.0
    %1341 = vmatprep.subr.mxu0 0.0
    %1342 = vmatpush1.msra.mxu0 0.0
    %1343 = vmatprep.subr.mxu0 0.0
    %1344 = vmatpush1.msra.mxu0 0.0
    %1345 = vmatprep.subr.mxu0 0.0
    %1346 = vmatpush1.msra.mxu0 %v1310
    %1347 = vmatprep.subr.mxu0 0.0
    %1348 = vmatpush1.msra.mxu0 %v1309
    %1349 = vmatprep.subr.mxu0 0.0
    %1350 = vmatpush1.msra.mxu0 %v1308
    %1351 = vmatprep.subr.mxu0 0.0
    %1352 = vmatpush1.msra.mxu0 %v1307
    %1353 = vmatprep.subr.mxu0 0.0
    %1354 = vmatpush2.msra.mxu0 0.0
    %1355 = vmatprep.subr.mxu0 0.0
    %1356 = vmatpush2.msra.mxu0 0.0
    %1357 = vmatprep.subr.mxu0 0.0
    %1358 = vmatpush2.msra.mxu0 0.0
    %1359 = vmatprep.subr.mxu0 0.0
    %1360 = vmatpush2.msra.mxu0 0.0
    %1361 = vmatprep.subr.mxu0 0.0
    %1362 = vmatpush2.msra.mxu0 0.0
    %1363 = vmatprep.subr.mxu0 0.0
    %1364 = vmatpush2.msra.mxu0 0.0
    %1365 = vmatprep.subr.mxu0 0.0
    %1366 = vmatpush2.msra.mxu0 0.0
    %1367 = vmatprep.subr.mxu0 0.0
    %1368 = vmatpush2.msra.mxu0 0.0
    %1369 = vmatprep.subr.mxu0 0.0
    %1370 = vmatpush2.msra.mxu0 0.0
    %1371 = vmatprep.subr.mxu0 0.0
    %1372 = vmatpush2.msra.mxu0 0.0
    %1373 = vmatprep.subr.mxu0 0.0
    %1374 = vmatpush2.msra.mxu0 0.0
    %1375 = vmatprep.subr.mxu0 0.0
    %1376 = vmatpush2.msra.mxu0 0.0
    %1377 = vmatprep.subr.mxu0 0.0
    %1378 = vmatpush2.msra.mxu0 0.0
    %1379 = vmatprep.subr.mxu0 0.0
    %1380 = vmatpush2.msra.mxu0 0.0
    %1381 = vmatprep.subr.mxu0 0.0
    %1382 = vmatpush2.msra.mxu0 0.0
    %1383 = vmatprep.subr.mxu0 0.0
    %1384 = vmatpush2.msra.mxu0 0.0
    %1385 = vmatprep.mubr.f32.mxu0 0.0
    %1386 = vmatmul.mubr.f32.gmra.mxu0 %v1319
    %v1387 = vpop.f32.mrf.mxu0
    %v1388 = vadd.f32 %v1315, %v1387
    %v1389 = vpop.f32.mrf.mxu0
    %1390 = vdwg.mxu0
    %v1393 = vunpack.c.l.s4 1966171168
    %v1394 = vunpack.c.0.s8 %v1393
    %v1395 = vlaneseq
    %v1396 = vshrl.u32 %v1395, 7
    %v1397 = vsub.s32 %v1394, %v1396
    %v1398 = vrot.slane %v1388, %v1397
    %v1399 = vcombine.high %v1398, %v1398
    %v1401 = vunpack.c.l.s4 1966171168
    %v1402 = vunpack.c.0.s8 %v1401
    %v1403 = vlaneseq
    %v1404 = vshrl.u32 %v1403, 7
    %v1405 = vsub.s32 %v1402, %v1404
    %v1406 = vrot.slane %v1398, %v1405
    %v1408 = vunpack.c.l.s4 1966171168
    %v1409 = vunpack.c.0.s8 %v1408
    %v1410 = vlaneseq
    %v1411 = vshrl.u32 %v1410, 7
    %v1412 = vsub.s32 %v1409, %v1411
    %v1413 = vrot.slane %v1399, %v1412
    %v1414 = vlaneseq
    %v1415 = vshrl.u32 %v1414, 7
    %v1416 = vsub.s32 0, %v1415
    %v1417 = vrot.slane %v272, %v1416
    %1419 = vbcast.lane.b32.xlu0 %v1417, 256
    %v1420 = vpop.permute.xlu0 %1419
    %s1422 = sor.u32 256, 8
    %1423 = vbcast.lane.b32.xlu0 %v1417, %s1422
    %v1424 = vpop.permute.xlu0 %1423
    %s1426 = sor.u32 256, 16
    %1427 = vbcast.lane.b32.xlu0 %v1417, %s1426
    %v1428 = vpop.permute.xlu0 %1427
    %s1430 = sor.u32 256, 24
    %1431 = vbcast.lane.b32.xlu0 %v1417, %s1430
    %v1432 = vpop.permute.xlu0 %1431
    %v1433 = vlaneseq
    %v1434 = vshrl.u32 %v1433, 7
    %v1435 = vsub.s32 1, %v1434
    %v1436 = vrot.slane %v272, %v1435
    %1438 = vbcast.lane.b32.xlu0 %v1436, 256
    %v1439 = vpop.permute.xlu0 %1438
    %s1441 = sor.u32 256, 8
    %1442 = vbcast.lane.b32.xlu0 %v1436, %s1441
    %v1443 = vpop.permute.xlu0 %1442
    %s1445 = sor.u32 256, 16
    %1446 = vbcast.lane.b32.xlu0 %v1436, %s1445
    %v1447 = vpop.permute.xlu0 %1446
    %s1449 = sor.u32 256, 24
    %1450 = vbcast.lane.b32.xlu0 %v1436, %s1449
    %v1451 = vpop.permute.xlu0 %1450
    %v1452 = vlaneseq
    %v1453 = vshrl.u32 %v1452, 7
    %v1454 = vsub.s32 0, %v1453
    %v1455 = vrot.slane %v1406, %v1454
    %v1456 = vlaneseq
    %v1457 = vshrl.u32 %v1456, 7
    %v1458 = vsub.s32 0, %v1457
    %v1459 = vrot.slane %v1413, %v1458
    %v1462 = vadd.f32 %v1455, %v1420
    %v1463 = vadd.f32 %v1455, %v1424
    %v1464 = vadd.f32 %v1455, %v1428
    %v1465 = vadd.f32 %v1455, %v1432
    %v1466 = vadd.f32 %v1459, %v1439
    %v1467 = vadd.f32 %v1459, %v1443
    %v1468 = vadd.f32 %v1459, %v1447
    %v1469 = vadd.f32 %v1459, %v1451
    %v1470 = vmax.f32 %v1462, 0.0
    %v1471 = vmax.f32 %v1463, 0.0
    %v1472 = vmax.f32 %v1464, 0.0
    %v1473 = vmax.f32 %v1465, 0.0
    %v1474 = vmax.f32 %v1466, 0.0
    %v1475 = vmax.f32 %v1467, 0.0
    %v1476 = vmax.f32 %v1468, 0.0
    %v1477 = vmax.f32 %v1469, 0.0
    %v1478 = vld [vmem:[#allocation6 + $0xb] sm:$0x1]
    %v1479 = vlaneseq
    %v1480 = vshrl.u32 %v1479, 7
    %v1481 = vsub.s32 0, %v1480
    %v1482 = vrot.slane %v1478, %v1481
    %v1483 = vmul.f32 %v1470, %v1482
    %v1484 = vmul.f32 %v1471, %v1482
    %v1485 = vmul.f32 %v1472, %v1482
    %v1486 = vmul.f32 %v1473, %v1482
    %v1487 = vmul.f32 %v1474, %v1482
    %v1488 = vmul.f32 %v1475, %v1482
    %v1489 = vmul.f32 %v1476, %v1482
    %v1490 = vmul.f32 %v1477, %v1482
    %v1491 = vsel %vm80, %v1483, 0.0
    %1492 = vadd.xlane.f32.xlu0 %v1491
    %v1493 = vpop.xlane.xlu0 %1492
    %v1494 = vsel %vm80, %v1484, 0.0
    %1495 = vadd.xlane.f32.xlu0 %v1494
    %v1496 = vpop.xlane.xlu0 %1495
    %v1497 = vsel %vm80, %v1485, 0.0
    %1498 = vadd.xlane.f32.xlu0 %v1497
    %v1499 = vpop.xlane.xlu0 %1498
    %v1500 = vsel %vm80, %v1486, 0.0
    %1501 = vadd.xlane.f32.xlu0 %v1500
    %v1502 = vpop.xlane.xlu0 %1501
    %v1503 = vsel %vm80, %v1487, 0.0
    %1504 = vadd.xlane.f32.xlu0 %v1503
    %v1505 = vpop.xlane.xlu0 %1504
    %v1506 = vsel %vm80, %v1488, 0.0
    %1507 = vadd.xlane.f32.xlu0 %v1506
    %v1508 = vpop.xlane.xlu0 %1507
    %v1509 = vsel %vm80, %v1489, 0.0
    %1510 = vadd.xlane.f32.xlu0 %v1509
    %v1511 = vpop.xlane.xlu0 %1510
    %v1512 = vsel %vm80, %v1490, 0.0
    %1513 = vadd.xlane.f32.xlu0 %v1512
    %v1514 = vpop.xlane.xlu0 %1513
    %v1515 = vld [vmem:[#allocation6 + $0xc] sm:$0x1]
    %v1516 = vlaneseq
    %v1517 = vshrl.u32 %v1516, 7
    %v1518 = vsub.s32 0, %v1517
    %v1519 = vrot.slane %v1515, %v1518
    %1522 = vbcast.lane.b32.xlu0 %v1519, 256
    %v1523 = vpop.permute.xlu0 %1522
    %s1525 = sor.u32 256, 8
    %1526 = vbcast.lane.b32.xlu0 %v1519, %s1525
    %v1527 = vpop.permute.xlu0 %1526
    %s1529 = sor.u32 256, 16
    %1530 = vbcast.lane.b32.xlu0 %v1519, %s1529
    %v1531 = vpop.permute.xlu0 %1530
    %s1533 = sor.u32 256, 24
    %1534 = vbcast.lane.b32.xlu0 %v1519, %s1533
    %v1535 = vpop.permute.xlu0 %1534
    %v1540 = vadd.f32 %v1493, %v1523
    %v1541 = vadd.f32 %v1496, %v1527
    %v1542 = vadd.f32 %v1499, %v1531
    %v1543 = vadd.f32 %v1502, %v1535
    %v1544 = vadd.f32 %v1505, %v1523
    %v1545 = vadd.f32 %v1508, %v1527
    %v1546 = vadd.f32 %v1511, %v1531
    %v1547 = vadd.f32 %v1514, %v1535
    %v1548 = vxor.u32 %v1540, 2147483648
    %v1549 = vxor.u32 %v1541, 2147483648
    %v1550 = vxor.u32 %v1542, 2147483648
    %v1551 = vxor.u32 %v1543, 2147483648
    %v1552 = vxor.u32 %v1544, 2147483648
    %v1553 = vxor.u32 %v1545, 2147483648
    %v1554 = vxor.u32 %v1546, 2147483648
    %v1555 = vxor.u32 %v1547, 2147483648
    %v1556 = vmul.f32 %v1548, 1.442695
    %v1557 = vpow.pop %v1556
    %v1558 = vmul.f32 %v1549, 1.442695
    %v1559 = vpow.pop %v1558
    %v1560 = vmul.f32 %v1550, 1.442695
    %v1561 = vpow.pop %v1560
    %v1562 = vmul.f32 %v1551, 1.442695
    %v1563 = vpow.pop %v1562
    %v1564 = vmul.f32 %v1552, 1.442695
    %v1565 = vpow.pop %v1564
    %v1566 = vmul.f32 %v1553, 1.442695
    %v1567 = vpow.pop %v1566
    %v1568 = vmul.f32 %v1554, 1.442695
    %v1569 = vpow.pop %v1568
    %v1570 = vmul.f32 %v1555, 1.442695
    %v1571 = vpow.pop %v1570
    %v1572 = vadd.f32 %v1557, 1.0
    %v1573 = vadd.f32 %v1559, 1.0
    %v1574 = vadd.f32 %v1561, 1.0
    %v1575 = vadd.f32 %v1563, 1.0
    %v1576 = vadd.f32 %v1565, 1.0
    %v1577 = vadd.f32 %v1567, 1.0
    %v1578 = vadd.f32 %v1569, 1.0
    %v1579 = vadd.f32 %v1571, 1.0
    %v1580 = vrcp.pop %v1572
    %v1581 = vmul.f32 1.0, %v1580
    %v1582 = vrcp.pop %v1573
    %v1583 = vmul.f32 1.0, %v1582
    %v1584 = vrcp.pop %v1574
    %v1585 = vmul.f32 1.0, %v1584
    %v1586 = vrcp.pop %v1575
    %v1587 = vmul.f32 1.0, %v1586
    %v1588 = vrcp.pop %v1576
    %v1589 = vmul.f32 1.0, %v1588
    %v1590 = vrcp.pop %v1577
    %v1591 = vmul.f32 1.0, %v1590
    %v1592 = vrcp.pop %v1578
    %v1593 = vmul.f32 1.0, %v1592
    %v1594 = vrcp.pop %v1579
    %v1595 = vmul.f32 1.0, %v1594
    %1604 = vset.pattern.permute.xlu0 0
    %1605 = vperm.xlu0 %1604, %v1581
    %v1606 = vpop.permute.xlu0 %1605
    %1607 = vset.pattern.permute.xlu0 0
    %1608 = vperm.xlu0 %1607, %v1583
    %v1609 = vpop.permute.xlu0 %1608
    %1610 = vset.pattern.permute.xlu0 0
    %1611 = vperm.xlu0 %1610, %v1585
    %v1612 = vpop.permute.xlu0 %1611
    %1613 = vset.pattern.permute.xlu0 0
    %1614 = vperm.xlu0 %1613, %v1587
    %v1615 = vpop.permute.xlu0 %1614
    %1616 = vset.pattern.permute.xlu0 0
    %1617 = vperm.xlu0 %1616, %v1589
    %v1618 = vpop.permute.xlu0 %1617
    %1619 = vset.pattern.permute.xlu0 0
    %1620 = vperm.xlu0 %1619, %v1591
    %v1621 = vpop.permute.xlu0 %1620
    %1622 = vset.pattern.permute.xlu0 0
    %1623 = vperm.xlu0 %1622, %v1593
    %v1624 = vpop.permute.xlu0 %1623
    %1625 = vset.pattern.permute.xlu0 0
    %1626 = vperm.xlu0 %1625, %v1595
    %v1627 = vpop.permute.xlu0 %1626
    %v1628 = vlaneseq
    %v1629 = vand.u32 %v1628, 127
    %v1630 = vlaneseq
    %v1631 = vshrl.u32 %v1630, 7
    %v1632 = vsub.s32 %v1629, %v1631
    %v1633 = vrot.slane %v1606, %v1632
    %v1634 = vadd.s32 %v1629, 4294967288
    %v1635 = vlaneseq
    %v1636 = vshrl.u32 %v1635, 7
    %v1637 = vsub.s32 %v1634, %v1636
    %v1638 = vrot.slane %v1609, %v1637
    %vm1639 = vcmask 130112
    %v1640 = vsel %vm1639, %v1638, %v1633
    %v1641 = vadd.s32 %v1629, 4294967280
    %v1642 = vlaneseq
    %v1643 = vshrl.u32 %v1642, 7
    %v1644 = vsub.s32 %v1641, %v1643
    %v1645 = vrot.slane %v1612, %v1644
    %vm1646 = vcmask 195712
    %v1647 = vsel %vm1646, %v1645, %v1640
    %v1648 = vadd.s32 %v1629, 4294967272
    %v1649 = vlaneseq
    %v1650 = vshrl.u32 %v1649, 7
    %v1651 = vsub.s32 %v1648, %v1650
    %v1652 = vrot.slane %v1615, %v1651
    %vm1653 = vcmask 261312
    %v1654 = vsel %vm1653, %v1652, %v1647
    %v1655 = vlaneseq
    %v1656 = vshrl.u32 %v1655, 7
    %v1657 = vsub.s32 %v1629, %v1656
    %v1658 = vrot.slane %v1618, %v1657
    %v1659 = vlaneseq
    %v1660 = vshrl.u32 %v1659, 7
    %v1661 = vsub.s32 %v1634, %v1660
    %v1662 = vrot.slane %v1621, %v1661
    %v1663 = vsel %vm1639, %v1662, %v1658
    %v1664 = vlaneseq
    %v1665 = vshrl.u32 %v1664, 7
    %v1666 = vsub.s32 %v1641, %v1665
    %v1667 = vrot.slane %v1624, %v1666
    %v1668 = vsel %vm1646, %v1667, %v1663
    %v1669 = vlaneseq
    %v1670 = vshrl.u32 %v1669, 7
    %v1671 = vsub.s32 %v1648, %v1670
    %v1672 = vrot.slane %v1627, %v1671
    %v1673 = vsel %vm1653, %v1672, %v1668
    %vm1674 = vcmask 1041409
    %v1675 = vsel %vm1674, %v1673, %v1654
    %1677 = vst.msk [vmem:[#allocation9] sm:$0x3] %vm238, %v1675
    // Predicated region
    $region42: #{model_layer_forward.1} parent=1 // pred_check
      _
    $region43: #{model_layer_forward.1} parent=1 // pred_check_branch
      %1679 = sbr.rel (0) target = $region45
    $region44: #{model_layer_forward.1} parent=1 // pred_region
      %s1681 = ssub.s32 32, 32
      %1682 = vsyncadd [#allocation5], %s1681
      %s1684 = sshll.u32 [#allocation9], 4
      %s1685 = int_to_ptr.vmem [resolvable:$true] %s1684
      %1687 = dma.vmem_to_hbm [thread:$0]  %s1685, 32, %s7, [#allocation5]
    $region45: #{model_layer_forward.1} parent=1 // pred_fallthru
      _
    // Predicated region
    $region46: #{model_layer_forward.1} parent=1 // pred_check
      _
    $region47: #{model_layer_forward.1} parent=1 // pred_check_branch
      %1689 = sbr.rel (0) target = $region49
    $region48: #{model_layer_forward.1} parent=1 // pred_region
      %1690 = dma.done [#allocation5], 32
    $region49: #{model_layer_forward.1} parent=1 // pred_fallthru
      _
    %1691 = vsyncpa [#allocation4], 1
    %1692 = vsyncpa [#allocation7], 1
    %1693 = vsyncpa [#allocation5], 1

</llo_original>
